<compile_context>
chip_gen: v6e
topology: v6e:2x2x1
jax: 0.10.0
libtpu: 0.0.40
codegen_flags: <defaults>
</compile_context>

<pallas_src>
import jax
import jax.numpy as jnp
from jax.experimental import pallas as pl
from jax.experimental.pallas import tpu as pltpu

LANES = 128          # lane-dense output width
C1_OUT, C2_OUT = 10, 20
FC_HID, FC_OUT = 128, 10
_TM_CONV = 1024      # row-tile cap for conv kernels (VMEM-safe on v7x)
_TM_FC = 512         # row-tile cap for the fused FC kernel


# ----------------------------- Pallas kernels ----------------------------- #

def _conv_relu_pool_kernel(p_ref, w_ref, b_ref, o_ref):
    """p_ref: (4, TM, K) pooling-quadrant patches, w_ref: (K, 128) zero-padded,
    b_ref: (1, 128) zero-padded.  o = relu(max_q(p_q @ w) + b), lane-dense."""
    w = w_ref[...]
    acc = jnp.dot(p_ref[0], w, preferred_element_type=jnp.float32)
    for q in range(1, p_ref.shape[0]):
        acc = jnp.maximum(acc, jnp.dot(p_ref[q], w,
                                       preferred_element_type=jnp.float32))
    acc = acc + b_ref[...]
    o_ref[...] = jnp.maximum(acc, 0.0).astype(o_ref.dtype)


def _fc_fused_kernel(x_ref, w1_ref, b1_ref, w2_ref, b2_ref, o_ref):
    """o = (relu(x @ w1 + b1)) @ w2 + b2 ; hidden (TM,128) never leaves VMEM."""
    h = jnp.dot(x_ref[...], w1_ref[...], preferred_element_type=jnp.float32)
    h = jnp.maximum(h + b1_ref[...], 0.0)
    o = jnp.dot(h, w2_ref[...], preferred_element_type=jnp.float32) + b2_ref[...]
    o_ref[...] = o.astype(o_ref.dtype)


def conv_relu_pool(patches, w, b):
    """patches: (4, M, K), w: (K, 128), b: (1, 128) -> (M, 128)."""
    nq, m, k = patches.shape
    n_out = w.shape[1]
    tm = m if m <= _TM_CONV else _TM_CONV
    grid = (pl.cdiv(m, tm),)
    flops = 2 * nq * m * k * n_out
    bytes_acc = 4 * (patches.size + w.size + b.size + m * n_out)
    return pl.pallas_call(
        _conv_relu_pool_kernel,
        out_shape=jax.ShapeDtypeStruct((m, n_out), jnp.float32),
        grid=grid,
        in_specs=[
            pl.BlockSpec((nq, tm, k), lambda i: (0, i, 0)),
            pl.BlockSpec((k, n_out), lambda i: (0, 0)),
            pl.BlockSpec((1, n_out), lambda i: (0, 0)),
        ],
        out_specs=pl.BlockSpec((tm, n_out), lambda i: (i, 0)),
        compiler_params=pltpu.CompilerParams(
            dimension_semantics=("parallel",)),
        cost_estimate=pl.CostEstimate(
            flops=flops, transcendentals=0, bytes_accessed=bytes_acc),
    )(patches, w, b)


def fc1_relu_fc2(x, w1, b1, w2, b2):
    """x: (N, 500), w1: (500, 128), w2: (128, 128 zero-padded) -> (N, 128)."""
    m, k1 = x.shape
    hid = w1.shape[1]
    n_out = w2.shape[1]
    tm = m if m <= _TM_FC else _TM_FC
    grid = (pl.cdiv(m, tm),)
    flops = 2 * m * (k1 * hid + hid * n_out)
    bytes_acc = 4 * (x.size + w1.size + b1.size + w2.size + b2.size + m * n_out)
    return pl.pallas_call(
        _fc_fused_kernel,
        out_shape=jax.ShapeDtypeStruct((m, n_out), jnp.float32),
        grid=grid,
        in_specs=[
            pl.BlockSpec((tm, k1), lambda i: (i, 0)),
            pl.BlockSpec((k1, hid), lambda i: (0, 0)),
            pl.BlockSpec((1, hid), lambda i: (0, 0)),
            pl.BlockSpec((hid, n_out), lambda i: (0, 0)),
            pl.BlockSpec((1, n_out), lambda i: (0, 0)),
        ],
        out_specs=pl.BlockSpec((tm, n_out), lambda i: (i, 0)),
        compiler_params=pltpu.CompilerParams(
            dimension_semantics=("parallel",)),
        cost_estimate=pl.CostEstimate(
            flops=flops, transcendentals=0, bytes_accessed=bytes_acc),
    )(x, w1, b1, w2, b2)


# ------------------------------- JAX glue --------------------------------- #

def _pooled_quadrant_patches(x, k):
    """x: (N, H, W, C) channel-last.  Valid kxk conv followed by 2x2 max-pool
    (floor).  Returns (patches, Hp, Wp) with patches (4, N*Hp*Wp, k*k*C);
    quadrant q=(qy,qx) holds the im2col row of conv-output position
    (2i+qy, 2j+qx).  Feature order is (dy, dx, c), matching a
    (kh, kw, Cin, Cout)-reshaped conv weight.  Positions dropped by the
    floor-pool are never generated."""
    n, h, w, c = x.shape
    ho, wo = h - k + 1, w - k + 1
    hp, wp = ho // 2, wo // 2
    quads = []
    for qy in range(2):
        for qx in range(2):
            feats = []
            for dy in range(k):
                for dx in range(k):
                    ys, xs = qy + dy, qx + dx
                    feats.append(x[:, ys:ys + 2 * hp:2, xs:xs + 2 * wp:2, :])
            q = jnp.stack(feats, axis=3)                    # (N,hp,wp,k*k,C)
            quads.append(q.reshape(n * hp * wp, k * k * c))
    return jnp.stack(quads, axis=0), hp, wp


def _pad_lanes(a, n):
    pad = n - a.shape[-1]
    if pad <= 0:
        return a
    return jnp.pad(a, [(0, 0)] * (a.ndim - 1) + [(0, pad)])


def init_params(key):
    """Synthetic parameters in PyTorch layout/shapes (fan-in scaled)."""
    ks = jax.random.split(key, 8)

    def rnd(k, shape, fan_in):
        return (1.0 / jnp.sqrt(fan_in)) * jax.random.normal(k, shape, jnp.float32)

    return {
        "conv1_w": rnd(ks[0], (10, 1, 3, 3), 9),
        "conv1_b": rnd(ks[1], (10,), 9),
        "conv2_w": rnd(ks[2], (20, 10, 3, 3), 90),
        "conv2_b": rnd(ks[3], (20,), 90),
        "fc1_w": rnd(ks[4], (128, 500), 500),   # (out, in) like torch
        "fc1_b": rnd(ks[5], (128,), 500),
        "fc2_w": rnd(ks[6], (10, 128), 128),
        "fc2_b": rnd(ks[7], (10,), 128),
    }


def prepare_params(p):
    """One-time (outside the hot path) layout conversion + lane padding:
    conv weights -> (kh*kw*Cin, 128), fc weights -> (in, out_padded); fc1's
    input ordering is permuted from NCHW-flatten (c,h,w) to the kernel's
    channel-last (h,w,c) ordering."""
    def conv_w(w):
        cout = w.shape[0]
        wm = jnp.transpose(w, (2, 3, 1, 0)).reshape(-1, cout)   # (kh*kw*Cin, Cout)
        return _pad_lanes(wm, LANES)

    def row_b(b):
        return _pad_lanes(b.reshape(1, -1), LANES)

    fc1_w = (p["fc1_w"].reshape(FC_HID, C2_OUT, 5, 5)
             .transpose(0, 2, 3, 1).reshape(FC_HID, 500).T)     # (500, 128)
    return {
        "c1_w": conv_w(p["conv1_w"]), "c1_b": row_b(p["conv1_b"]),
        "c2_w": conv_w(p["conv2_w"]), "c2_b": row_b(p["conv2_b"]),
        "fc1_w": fc1_w, "fc1_b": p["fc1_b"].reshape(1, FC_HID),
        "fc2_w": _pad_lanes(p["fc2_w"].T, LANES),               # (128, 128)
        "fc2_b": row_b(p["fc2_b"]),
    }


# ----------------------------- model forward ------------------------------ #

@jax.jit
def simple_cnn_forward(kparams, x):
    """x: (N, 1, 28, 28) NCHW float32 -> logits (N, 10)."""
    n = x.shape[0]
    x = jnp.transpose(x, (0, 2, 3, 1))                     # NCHW -> NHWC
    # conv1 + relu + pool fused: (N,28,28,1) -> (N*13*13, 128)
    p1, hp1, wp1 = _pooled_quadrant_patches(x, 3)
    o1 = conv_relu_pool(p1, kparams["c1_w"], kparams["c1_b"])
    h1 = o1[:, :C1_OUT].reshape(n, hp1, wp1, C1_OUT)
    # conv2 + relu + pool fused: (N,13,13,10) -> (N*5*5, 128)
    # TODO(synk): patch extraction (im2col) still runs as XLA glue in HBM; an
    # in-kernel gather from a resident VMEM tile would cut it further.
    p2, hp2, wp2 = _pooled_quadrant_patches(h1, 3)
    o2 = conv_relu_pool(p2, kparams["c2_w"], kparams["c2_b"])
    # flatten (h, w, c) ordering — fc1 weight was permuted to match.
    feat = o2[:, :C2_OUT].reshape(n, hp2 * wp2 * C2_OUT)   # (N, 500)
    # fc1 + relu + fc2 fused, lane-dense (N, 128) output.
    logits = fc1_relu_fc2(feat, kparams["fc1_w"], kparams["fc1_b"],
                          kparams["fc2_w"], kparams["fc2_b"])
    return logits[:, :FC_OUT]


# ------------------------- pure-JAX reference ------------------------------ #

def _reference_forward(params, x):
    """Straight PyTorch-semantics reference (NCHW, torch-layout params)."""
    def conv(y, w, b):
        y = jax.lax.conv_general_dilated(
            y, w, window_strides=(1, 1), padding="VALID",
            dimension_numbers=("NCHW", "OIHW", "NCHW"))
        return y + b.reshape(1, -1, 1, 1)

    def pool(y):
        n, c, h, w = y.shape
        hh, ww = h // 2, w // 2
        y = y[:, :, : hh * 2, : ww * 2].reshape(n, c, hh, 2, ww, 2)
        return y.max(axis=(3, 5))

    h = pool(jax.nn.relu(conv(x, params["conv1_w"], params["conv1_b"])))
    h = pool(jax.nn.relu(conv(h, params["conv2_w"], params["conv2_b"])))
    h = h.reshape(h.shape[0], -1)
    h = jax.nn.relu(h @ params["fc1_w"].T + params["fc1_b"])
    return h @ params["fc2_w"].T + params["fc2_b"]


if __name__ == "__main__":
    key = jax.random.PRNGKey(0)
    pkey, xkey = jax.random.split(key)
    params = init_params(pkey)          # PyTorch-layout params
    kparams = prepare_params(params)    # one-time layout/pad conversion
    # fc1 expects 20*5*5 features, which fixes the input at (N, 1, 28, 28).
    x = jax.random.normal(xkey, (2, 1, 28, 28), jnp.float32)

    logits = simple_cnn_forward(kparams, x)
    jax.block_until_ready(logits)
    assert logits.shape == (2, 10) and logits.dtype == jnp.float32

    ref = _reference_forward(params, x)
    err = float(jnp.max(jnp.abs(logits - ref)))
    assert bool(jnp.allclose(logits, ref, atol=2e-2, rtol=1e-2)), err

    print("KERNEL_OK")
</pallas_src>

<mosaic_0001>
module attributes {stable_mosaic.version = 11 : i64} {
  func.func @_conv_relu_pool_kernel(%arg0: i32, %arg1: memref<4x338x9xf32, #tpu.memory_space<vmem>>, %arg2: memref<9x128xf32, #tpu.memory_space<vmem>>, %arg3: memref<1x128xf32, #tpu.memory_space<vmem>>, %arg4: memref<338x128xf32, #tpu.memory_space<vmem>>) attributes {dimension_semantics = [#tpu.dimension_semantics<parallel>], iteration_bounds = array<i64: 1>, scalar_prefetch = 0 : i64, scratch_operands = 0 : i64, tpu.core_type = #tpu.core_type<tc>, window_params = [{transform_indices = @transform_0, window_bounds = array<i64: 4, 338, 9>}, {pipeline_mode = #tpu.pipeline_mode<synchronous>, transform_indices = @transform_1, window_bounds = array<i64: 9, 128>}, {pipeline_mode = #tpu.pipeline_mode<synchronous>, transform_indices = @transform_2, window_bounds = array<i64: 1, 128>}, {transform_indices = @transform_3, window_bounds = array<i64: 338, 128>}]} {
    %c0 = arith.constant 0 : index
    %c0_0 = arith.constant 0 : index
    %0 = vector.load %arg2[%c0, %c0_0] : memref<9x128xf32, #tpu.memory_space<vmem>>, vector<9x128xf32>
    %c0_1 = arith.constant 0 : index
    %c0_2 = arith.constant 0 : index
    %c0_3 = arith.constant 0 : index
    %1 = vector.load %arg1[%c0_1, %c0_2, %c0_3] : memref<4x338x9xf32, #tpu.memory_space<vmem>>, vector<1x338x9xf32>
    %2 = vector.shape_cast %1 : vector<1x338x9xf32> to vector<338x9xf32>
    %cst = arith.constant dense<0.000000e+00> : vector<338x128xf32>
    %3 = tpu.matmul %2, %0, %cst {dimension_numbers = #tpu.dot_dimension_numbers<[1], [0], [0], [1], [0, 0, 1, 1], [], []>} : vector<338x9xf32>, vector<9x128xf32>, vector<338x128xf32> -> vector<338x128xf32>
    %c1 = arith.constant 1 : index
    %c0_4 = arith.constant 0 : index
    %c0_5 = arith.constant 0 : index
    %4 = vector.load %arg1[%c1, %c0_4, %c0_5] : memref<4x338x9xf32, #tpu.memory_space<vmem>>, vector<1x338x9xf32>
    %5 = vector.shape_cast %4 : vector<1x338x9xf32> to vector<338x9xf32>
    %cst_6 = arith.constant dense<0.000000e+00> : vector<338x128xf32>
    %6 = tpu.matmul %5, %0, %cst_6 {dimension_numbers = #tpu.dot_dimension_numbers<[1], [0], [0], [1], [0, 0, 1, 1], [], []>} : vector<338x9xf32>, vector<9x128xf32>, vector<338x128xf32> -> vector<338x128xf32>
    %7 = arith.maximumf %3, %6 : vector<338x128xf32>
    %c2 = arith.constant 2 : index
    %c0_7 = arith.constant 0 : index
    %c0_8 = arith.constant 0 : index
    %8 = vector.load %arg1[%c2, %c0_7, %c0_8] : memref<4x338x9xf32, #tpu.memory_space<vmem>>, vector<1x338x9xf32>
    %9 = vector.shape_cast %8 : vector<1x338x9xf32> to vector<338x9xf32>
    %cst_9 = arith.constant dense<0.000000e+00> : vector<338x128xf32>
    %10 = tpu.matmul %9, %0, %cst_9 {dimension_numbers = #tpu.dot_dimension_numbers<[1], [0], [0], [1], [0, 0, 1, 1], [], []>} : vector<338x9xf32>, vector<9x128xf32>, vector<338x128xf32> -> vector<338x128xf32>
    %11 = arith.maximumf %7, %10 : vector<338x128xf32>
    %c3 = arith.constant 3 : index
    %c0_10 = arith.constant 0 : index
    %c0_11 = arith.constant 0 : index
    %12 = vector.load %arg1[%c3, %c0_10, %c0_11] : memref<4x338x9xf32, #tpu.memory_space<vmem>>, vector<1x338x9xf32>
    %13 = vector.shape_cast %12 : vector<1x338x9xf32> to vector<338x9xf32>
    %cst_12 = arith.constant dense<0.000000e+00> : vector<338x128xf32>
    %14 = tpu.matmul %13, %0, %cst_12 {dimension_numbers = #tpu.dot_dimension_numbers<[1], [0], [0], [1], [0, 0, 1, 1], [], []>} : vector<338x9xf32>, vector<9x128xf32>, vector<338x128xf32> -> vector<338x128xf32>
    %15 = arith.maximumf %11, %14 : vector<338x128xf32>
    %c0_13 = arith.constant 0 : index
    %c0_14 = arith.constant 0 : index
    %16 = vector.load %arg3[%c0_13, %c0_14] : memref<1x128xf32, #tpu.memory_space<vmem>>, vector<1x128xf32>
    %17 = vector.broadcast %16 : vector<1x128xf32> to vector<338x128xf32>
    %18 = arith.addf %15, %17 : vector<338x128xf32>
    %cst_15 = arith.constant 0.000000e+00 : f32
    %19 = vector.broadcast %cst_15 : f32 to vector<338x128xf32>
    %20 = arith.maximumf %18, %19 : vector<338x128xf32>
    %c0_16 = arith.constant 0 : index
    %c0_17 = arith.constant 0 : index
    %21 = vector.load %arg4[%c0_16, %c0_17] : memref<338x128xf32, #tpu.memory_space<vmem>>, vector<338x128xf32>
    tpu.vector_store %arg4[%c0_16, %c0_17], %20 {strides = array<i32>} : memref<338x128xf32, #tpu.memory_space<vmem>>, vector<338x128xf32>,
    return
  }
  func.func @transform_0(%arg0: i32) -> (i32, i32, i32) {
    %c0_i32 = arith.constant 0 : i32
    %c0_i32_0 = arith.constant 0 : i32
    %c0_i32_1 = arith.constant 0 : i32
    return %c0_i32, %arg0, %c0_i32_0 : i32, i32, i32
  }
  func.func @transform_1(%arg0: i32) -> (i32, i32) {
    %c0_i32 = arith.constant 0 : i32
    %c0_i32_0 = arith.constant 0 : i32
    %c0_i32_1 = arith.constant 0 : i32
    return %c0_i32, %c0_i32_0 : i32, i32
  }
  func.func @transform_2(%arg0: i32) -> (i32, i32) {
    %c0_i32 = arith.constant 0 : i32
    %c0_i32_0 = arith.constant 0 : i32
    %c0_i32_1 = arith.constant 0 : i32
    return %c0_i32, %c0_i32_0 : i32, i32
  }
  func.func @transform_3(%arg0: i32) -> (i32, i32) {
    %c0_i32 = arith.constant 0 : i32
    %c0_i32_0 = arith.constant 0 : i32
    return %arg0, %c0_i32 : i32, i32
  }
}

module attributes {stable_mosaic.version = 11 : i64} {
  func.func @_conv_relu_pool_kernel(%arg0: i32, %arg1: memref<4x50x90xf32, #tpu.memory_space<vmem>>, %arg2: memref<90x128xf32, #tpu.memory_space<vmem>>, %arg3: memref<1x128xf32, #tpu.memory_space<vmem>>, %arg4: memref<50x128xf32, #tpu.memory_space<vmem>>) attributes {dimension_semantics = [#tpu.dimension_semantics<parallel>], iteration_bounds = array<i64: 1>, scalar_prefetch = 0 : i64, scratch_operands = 0 : i64, tpu.core_type = #tpu.core_type<tc>, window_params = [{transform_indices = @transform_0, window_bounds = array<i64: 4, 50, 90>}, {pipeline_mode = #tpu.pipeline_mode<synchronous>, transform_indices = @transform_1, window_bounds = array<i64: 90, 128>}, {pipeline_mode = #tpu.pipeline_mode<synchronous>, transform_indices = @transform_2, window_bounds = array<i64: 1, 128>}, {transform_indices = @transform_3, window_bounds = array<i64: 50, 128>}]} {
    %c0 = arith.constant 0 : index
    %c0_0 = arith.constant 0 : index
    %0 = vector.load %arg2[%c0, %c0_0] : memref<90x128xf32, #tpu.memory_space<vmem>>, vector<90x128xf32>
    %c0_1 = arith.constant 0 : index
    %c0_2 = arith.constant 0 : index
    %c0_3 = arith.constant 0 : index
    %1 = vector.load %arg1[%c0_1, %c0_2, %c0_3] : memref<4x50x90xf32, #tpu.memory_space<vmem>>, vector<1x50x90xf32>
    %2 = vector.shape_cast %1 : vector<1x50x90xf32> to vector<50x90xf32>
    %cst = arith.constant dense<0.000000e+00> : vector<50x128xf32>
    %3 = tpu.matmul %2, %0, %cst {dimension_numbers = #tpu.dot_dimension_numbers<[1], [0], [0], [1], [0, 0, 1, 1], [], []>} : vector<50x90xf32>, vector<90x128xf32>, vector<50x128xf32> -> vector<50x128xf32>
    %c1 = arith.constant 1 : index
    %c0_4 = arith.constant 0 : index
    %c0_5 = arith.constant 0 : index
    %4 = vector.load %arg1[%c1, %c0_4, %c0_5] : memref<4x50x90xf32, #tpu.memory_space<vmem>>, vector<1x50x90xf32>
    %5 = vector.shape_cast %4 : vector<1x50x90xf32> to vector<50x90xf32>
    %cst_6 = arith.constant dense<0.000000e+00> : vector<50x128xf32>
    %6 = tpu.matmul %5, %0, %cst_6 {dimension_numbers = #tpu.dot_dimension_numbers<[1], [0], [0], [1], [0, 0, 1, 1], [], []>} : vector<50x90xf32>, vector<90x128xf32>, vector<50x128xf32> -> vector<50x128xf32>
    %7 = arith.maximumf %3, %6 : vector<50x128xf32>
    %c2 = arith.constant 2 : index
    %c0_7 = arith.constant 0 : index
    %c0_8 = arith.constant 0 : index
    %8 = vector.load %arg1[%c2, %c0_7, %c0_8] : memref<4x50x90xf32, #tpu.memory_space<vmem>>, vector<1x50x90xf32>
    %9 = vector.shape_cast %8 : vector<1x50x90xf32> to vector<50x90xf32>
    %cst_9 = arith.constant dense<0.000000e+00> : vector<50x128xf32>
    %10 = tpu.matmul %9, %0, %cst_9 {dimension_numbers = #tpu.dot_dimension_numbers<[1], [0], [0], [1], [0, 0, 1, 1], [], []>} : vector<50x90xf32>, vector<90x128xf32>, vector<50x128xf32> -> vector<50x128xf32>
    %11 = arith.maximumf %7, %10 : vector<50x128xf32>
    %c3 = arith.constant 3 : index
    %c0_10 = arith.constant 0 : index
    %c0_11 = arith.constant 0 : index
    %12 = vector.load %arg1[%c3, %c0_10, %c0_11] : memref<4x50x90xf32, #tpu.memory_space<vmem>>, vector<1x50x90xf32>
    %13 = vector.shape_cast %12 : vector<1x50x90xf32> to vector<50x90xf32>
    %cst_12 = arith.constant dense<0.000000e+00> : vector<50x128xf32>
    %14 = tpu.matmul %13, %0, %cst_12 {dimension_numbers = #tpu.dot_dimension_numbers<[1], [0], [0], [1], [0, 0, 1, 1], [], []>} : vector<50x90xf32>, vector<90x128xf32>, vector<50x128xf32> -> vector<50x128xf32>
    %15 = arith.maximumf %11, %14 : vector<50x128xf32>
    %c0_13 = arith.constant 0 : index
    %c0_14 = arith.constant 0 : index
    %16 = vector.load %arg3[%c0_13, %c0_14] : memref<1x128xf32, #tpu.memory_space<vmem>>, vector<1x128xf32>
    %17 = vector.broadcast %16 : vector<1x128xf32> to vector<50x128xf32>
    %18 = arith.addf %15, %17 : vector<50x128xf32>
    %cst_15 = arith.constant 0.000000e+00 : f32
    %19 = vector.broadcast %cst_15 : f32 to vector<50x128xf32>
    %20 = arith.maximumf %18, %19 : vector<50x128xf32>
    %c0_16 = arith.constant 0 : index
    %c0_17 = arith.constant 0 : index
    %21 = vector.load %arg4[%c0_16, %c0_17] : memref<50x128xf32, #tpu.memory_space<vmem>>, vector<50x128xf32>
    tpu.vector_store %arg4[%c0_16, %c0_17], %20 {strides = array<i32>} : memref<50x128xf32, #tpu.memory_space<vmem>>, vector<50x128xf32>,
    return
  }
  func.func @transform_0(%arg0: i32) -> (i32, i32, i32) {
    %c0_i32 = arith.constant 0 : i32
    %c0_i32_0 = arith.constant 0 : i32
    %c0_i32_1 = arith.constant 0 : i32
    return %c0_i32, %arg0, %c0_i32_0 : i32, i32, i32
  }
  func.func @transform_1(%arg0: i32) -> (i32, i32) {
    %c0_i32 = arith.constant 0 : i32
    %c0_i32_0 = arith.constant 0 : i32
    %c0_i32_1 = arith.constant 0 : i32
    return %c0_i32, %c0_i32_0 : i32, i32
  }
  func.func @transform_2(%arg0: i32) -> (i32, i32) {
    %c0_i32 = arith.constant 0 : i32
    %c0_i32_0 = arith.constant 0 : i32
    %c0_i32_1 = arith.constant 0 : i32
    return %c0_i32, %c0_i32_0 : i32, i32
  }
  func.func @transform_3(%arg0: i32) -> (i32, i32) {
    %c0_i32 = arith.constant 0 : i32
    %c0_i32_0 = arith.constant 0 : i32
    return %arg0, %c0_i32 : i32, i32
  }
}

module attributes {stable_mosaic.version = 11 : i64} {
  func.func @_fc_fused_kernel(%arg0: i32, %arg1: memref<2x500xf32, #tpu.memory_space<vmem>>, %arg2: memref<500x128xf32, #tpu.memory_space<vmem>>, %arg3: memref<1x128xf32, #tpu.memory_space<vmem>>, %arg4: memref<128x128xf32, #tpu.memory_space<vmem>>, %arg5: memref<1x128xf32, #tpu.memory_space<vmem>>, %arg6: memref<2x128xf32, #tpu.memory_space<vmem>>) attributes {dimension_semantics = [#tpu.dimension_semantics<parallel>], iteration_bounds = array<i64: 1>, scalar_prefetch = 0 : i64, scratch_operands = 0 : i64, tpu.core_type = #tpu.core_type<tc>, window_params = [{transform_indices = @transform_0, window_bounds = array<i64: 2, 500>}, {pipeline_mode = #tpu.pipeline_mode<synchronous>, transform_indices = @transform_1, window_bounds = array<i64: 500, 128>}, {pipeline_mode = #tpu.pipeline_mode<synchronous>, transform_indices = @transform_2, window_bounds = array<i64: 1, 128>}, {pipeline_mode = #tpu.pipeline_mode<synchronous>, transform_indices = @transform_3, window_bounds = array<i64: 128, 128>}, {pipeline_mode = #tpu.pipeline_mode<synchronous>, transform_indices = @transform_4, window_bounds = array<i64: 1, 128>}, {transform_indices = @transform_5, window_bounds = array<i64: 2, 128>}]} {
    %c0 = arith.constant 0 : index
    %c0_0 = arith.constant 0 : index
    %0 = vector.load %arg1[%c0, %c0_0] : memref<2x500xf32, #tpu.memory_space<vmem>>, vector<2x500xf32>
    %c0_1 = arith.constant 0 : index
    %c0_2 = arith.constant 0 : index
    %1 = vector.load %arg2[%c0_1, %c0_2] : memref<500x128xf32, #tpu.memory_space<vmem>>, vector<500x128xf32>
    %cst = arith.constant dense<0.000000e+00> : vector<2x128xf32>
    %2 = tpu.matmul %0, %1, %cst {dimension_numbers = #tpu.dot_dimension_numbers<[1], [0], [0], [1], [0, 0, 1, 1], [], []>} : vector<2x500xf32>, vector<500x128xf32>, vector<2x128xf32> -> vector<2x128xf32>
    %c0_3 = arith.constant 0 : index
    %c0_4 = arith.constant 0 : index
    %3 = vector.load %arg3[%c0_3, %c0_4] : memref<1x128xf32, #tpu.memory_space<vmem>>, vector<1x128xf32>
    %4 = vector.broadcast %3 : vector<1x128xf32> to vector<2x128xf32>
    %5 = arith.addf %2, %4 : vector<2x128xf32>
    %cst_5 = arith.constant 0.000000e+00 : f32
    %6 = vector.broadcast %cst_5 : f32 to vector<2x128xf32>
    %7 = arith.maximumf %5, %6 : vector<2x128xf32>
    %c0_6 = arith.constant 0 : index
    %c0_7 = arith.constant 0 : index
    %8 = vector.load %arg4[%c0_6, %c0_7] : memref<128x128xf32, #tpu.memory_space<vmem>>, vector<128x128xf32>
    %cst_8 = arith.constant dense<0.000000e+00> : vector<2x128xf32>
    %9 = tpu.matmul %7, %8, %cst_8 {dimension_numbers = #tpu.dot_dimension_numbers<[1], [0], [0], [1], [0, 0, 1, 1], [], []>} : vector<2x128xf32>, vector<128x128xf32>, vector<2x128xf32> -> vector<2x128xf32>
    %c0_9 = arith.constant 0 : index
    %c0_10 = arith.constant 0 : index
    %10 = vector.load %arg5[%c0_9, %c0_10] : memref<1x128xf32, #tpu.memory_space<vmem>>, vector<1x128xf32>
    %11 = vector.broadcast %10 : vector<1x128xf32> to vector<2x128xf32>
    %12 = arith.addf %9, %11 : vector<2x128xf32>
    %c0_11 = arith.constant 0 : index
    %c0_12 = arith.constant 0 : index
    %13 = vector.load %arg6[%c0_11, %c0_12] : memref<2x128xf32, #tpu.memory_space<vmem>>, vector<2x128xf32>
    tpu.vector_store %arg6[%c0_11, %c0_12], %12 {strides = array<i32>} : memref<2x128xf32, #tpu.memory_space<vmem>>, vector<2x128xf32>,
    return
  }
  func.func @transform_0(%arg0: i32) -> (i32, i32) {
    %c0_i32 = arith.constant 0 : i32
    %c0_i32_0 = arith.constant 0 : i32
    return %arg0, %c0_i32 : i32, i32
  }
  func.func @transform_1(%arg0: i32) -> (i32, i32) {
    %c0_i32 = arith.constant 0 : i32
    %c0_i32_0 = arith.constant 0 : i32
    %c0_i32_1 = arith.constant 0 : i32
    return %c0_i32, %c0_i32_0 : i32, i32
  }
  func.func @transform_2(%arg0: i32) -> (i32, i32) {
    %c0_i32 = arith.constant 0 : i32
    %c0_i32_0 = arith.constant 0 : i32
    %c0_i32_1 = arith.constant 0 : i32
    return %c0_i32, %c0_i32_0 : i32, i32
  }
  func.func @transform_3(%arg0: i32) -> (i32, i32) {
    %c0_i32 = arith.constant 0 : i32
    %c0_i32_0 = arith.constant 0 : i32
    %c0_i32_1 = arith.constant 0 : i32
    return %c0_i32, %c0_i32_0 : i32, i32
  }
  func.func @transform_4(%arg0: i32) -> (i32, i32) {
    %c0_i32 = arith.constant 0 : i32
    %c0_i32_0 = arith.constant 0 : i32
    %c0_i32_1 = arith.constant 0 : i32
    return %c0_i32, %c0_i32_0 : i32, i32
  }
  func.func @transform_5(%arg0: i32) -> (i32, i32) {
    %c0_i32 = arith.constant 0 : i32
    %c0_i32_0 = arith.constant 0 : i32
    return %arg0, %c0_i32 : i32, i32
  }
}

</mosaic_0001>

<llo_original>
// kernel: simple_cnn_forward.3
$region0: #{simple_cnn_forward.3}
  #allocation0 [shape = 'u32[]', space=smem, size = 0x4, offset = 0x4, fixed_abs, tag = 'smem constant byte address 0x4 - core index']
  #allocation1 [shape = 'u32[144,128]{1,0:T(1,128)}', space=vmem, size = 0x12000, scoped, tag = 'internal scratch']
  %s0 = inlined_call_operand.vmem [shape: f32[4,338,9], index: 0, kind: input, shape index: {}]
  %s1 = inlined_call_operand.vmem [shape: f32[9,128], index: 1, kind: input, shape index: {}]
  %s2 = inlined_call_operand.vmem [shape: f32[1,128], index: 2, kind: input, shape index: {}]
  %s3 = inlined_call_operand.vmem [shape: f32[338,128], index: 3, kind: output, shape index: {}]
  %s4 = sld [smem:[#allocation0]]
  $region22: #{simple_cnn_forward.3} parent=0
    _
  %s6 = ssub.s32 1, %s4
  %s7 = scalar_select 0, %s6, %s4
  // Predicated region
  $region2: #{simple_cnn_forward.3} parent=0 // pred_check
    _
  $region3: #{simple_cnn_forward.3} parent=0 // pred_check_branch
    %9 = sbr.rel (0) target = $region5
  $region4: #{simple_cnn_forward.3} parent=0 // pred_region
    _
  $region5: #{simple_cnn_forward.3} parent=0 // pred_fallthru
    _
  // Predicated region
  $region6: #{simple_cnn_forward.3} parent=0 // pred_check
    _
  $region7: #{simple_cnn_forward.3} parent=0 // pred_check_branch
    %11 = sbr.rel (0) target = $region9
  $region8: #{simple_cnn_forward.3} parent=0 // pred_region
    _
  $region9: #{simple_cnn_forward.3} parent=0 // pred_fallthru
    _
  // Predicated region
  $region10: #{simple_cnn_forward.3} parent=0 // pred_check
    _
  $region11: #{simple_cnn_forward.3} parent=0 // pred_check_branch
    %13 = sbr.rel (0) target = $region13
  $region12: #{simple_cnn_forward.3} parent=0 // pred_region
    _
  $region13: #{simple_cnn_forward.3} parent=0 // pred_fallthru
    _
  %v14 = vld [vmem:[%s1] sm:$0xff]
  %v15 = vld [vmem:[%s1 + $0x8] sm:$0x1]
  %v16 = vld [vmem:[%s0] sm:$0xff]
  %v17 = vld [vmem:[%s0 + $0x8] sm:$0xff]
  %v18 = vld [vmem:[%s0 + $0x10] sm:$0xff]
  %v19 = vld [vmem:[%s0 + $0x18] sm:$0xff]
  %v20 = vld [vmem:[%s0 + $0x20] sm:$0xff]
  %v21 = vld [vmem:[%s0 + $0x28] sm:$0xff]
  %v22 = vld [vmem:[%s0 + $0x30] sm:$0xff]
  %v23 = vld [vmem:[%s0 + $0x38] sm:$0xff]
  %v24 = vld [vmem:[%s0 + $0x40] sm:$0xff]
  %v25 = vld [vmem:[%s0 + $0x48] sm:$0xff]
  %v26 = vld [vmem:[%s0 + $0x50] sm:$0xff]
  %v27 = vld [vmem:[%s0 + $0x58] sm:$0xff]
  %v28 = vld [vmem:[%s0 + $0x60] sm:$0xff]
  %v29 = vld [vmem:[%s0 + $0x68] sm:$0xff]
  %v30 = vld [vmem:[%s0 + $0x70] sm:$0xff]
  %v31 = vld [vmem:[%s0 + $0x78] sm:$0xff]
  %v32 = vld [vmem:[%s0 + $0x80] sm:$0xff]
  %v33 = vld [vmem:[%s0 + $0x88] sm:$0xff]
  %v34 = vld [vmem:[%s0 + $0x90] sm:$0xff]
  %v35 = vld [vmem:[%s0 + $0x98] sm:$0xff]
  %v36 = vld [vmem:[%s0 + $0xa0] sm:$0xff]
  %v37 = vld [vmem:[%s0 + $0xa8] sm:$0xff]
  %v38 = vld [vmem:[%s0 + $0xb0] sm:$0xff]
  %v39 = vld [vmem:[%s0 + $0xb8] sm:$0xff]
  %v40 = vld [vmem:[%s0 + $0xc0] sm:$0xff]
  %v41 = vld [vmem:[%s0 + $0xc8] sm:$0xff]
  %v42 = vld [vmem:[%s0 + $0xd0] sm:$0xff]
  %v43 = vld [vmem:[%s0 + $0xd8] sm:$0xff]
  %v44 = vld [vmem:[%s0 + $0xe0] sm:$0xff]
  %v45 = vld [vmem:[%s0 + $0xe8] sm:$0xff]
  %v46 = vld [vmem:[%s0 + $0xf0] sm:$0xff]
  %v47 = vld [vmem:[%s0 + $0xf8] sm:$0xff]
  %v48 = vld [vmem:[%s0 + $0x100] sm:$0xff]
  %v49 = vld [vmem:[%s0 + $0x108] sm:$0xff]
  %v50 = vld [vmem:[%s0 + $0x110] sm:$0xff]
  %v51 = vld [vmem:[%s0 + $0x118] sm:$0xff]
  %v52 = vld [vmem:[%s0 + $0x120] sm:$0xff]
  %v53 = vld [vmem:[%s0 + $0x128] sm:$0xff]
  %v54 = vld [vmem:[%s0 + $0x130] sm:$0xff]
  %v55 = vld [vmem:[%s0 + $0x138] sm:$0xff]
  %v56 = vld [vmem:[%s0 + $0x140] sm:$0xff]
  %v57 = vld [vmem:[%s0 + $0x148] sm:$0xff]
  %v58 = vld [vmem:[%s0 + $0x150] sm:$0x3]
  %vm59 = vcmask 72704
  %v61 = vsel %vm59, %v16, 0
  %v64 = vsel %vm59, %v17, 0
  %v67 = vsel %vm59, %v18, 0
  %v70 = vsel %vm59, %v19, 0
  %v73 = vsel %vm59, %v20, 0
  %v76 = vsel %vm59, %v21, 0
  %v79 = vsel %vm59, %v22, 0
  %v82 = vsel %vm59, %v23, 0
  %v85 = vsel %vm59, %v24, 0
  %v88 = vsel %vm59, %v25, 0
  %v91 = vsel %vm59, %v26, 0
  %v94 = vsel %vm59, %v27, 0
  %v97 = vsel %vm59, %v28, 0
  %v100 = vsel %vm59, %v29, 0
  %v103 = vsel %vm59, %v30, 0
  %v106 = vsel %vm59, %v31, 0
  %v109 = vsel %vm59, %v32, 0
  %v112 = vsel %vm59, %v33, 0
  %v115 = vsel %vm59, %v34, 0
  %v118 = vsel %vm59, %v35, 0
  %v121 = vsel %vm59, %v36, 0
  %v124 = vsel %vm59, %v37, 0
  %v127 = vsel %vm59, %v38, 0
  %v130 = vsel %vm59, %v39, 0
  %v133 = vsel %vm59, %v40, 0
  %v136 = vsel %vm59, %v41, 0
  %v139 = vsel %vm59, %v42, 0
  %v142 = vsel %vm59, %v43, 0
  %v145 = vsel %vm59, %v44, 0
  %v148 = vsel %vm59, %v45, 0
  %v151 = vsel %vm59, %v46, 0
  %v154 = vsel %vm59, %v47, 0
  %v157 = vsel %vm59, %v48, 0
  %v160 = vsel %vm59, %v49, 0
  %v163 = vsel %vm59, %v50, 0
  %v166 = vsel %vm59, %v51, 0
  %v169 = vsel %vm59, %v52, 0
  %v172 = vsel %vm59, %v53, 0
  %v175 = vsel %vm59, %v54, 0
  %v178 = vsel %vm59, %v55, 0
  %v181 = vsel %vm59, %v56, 0
  %v184 = vsel %vm59, %v57, 0
  %v187 = vsel %vm59, %v58, 0
  %vm189 = vcmask 1040384
  %v191 = vsel %vm189, %v15, 0
  %193 = vmatprep.subr.mxu0 0.0
  %194 = vmatpush1.msra.mxu0 0.0
  %195 = vmatprep.subr.mxu0 0.0
  %196 = vmatpush1.msra.mxu0 0.0
  %197 = vmatprep.subr.mxu0 0.0
  %198 = vmatpush1.msra.mxu0 0.0
  %199 = vmatprep.subr.mxu0 0.0
  %200 = vmatpush1.msra.mxu0 0.0
  %201 = vmatprep.subr.mxu0 0.0
  %202 = vmatpush1.msra.mxu0 0.0
  %203 = vmatprep.subr.mxu0 0.0
  %204 = vmatpush1.msra.mxu0 0.0
  %205 = vmatprep.subr.mxu0 0.0
  %206 = vmatpush1.msra.mxu0 0.0
  %207 = vmatprep.subr.mxu0 0.0
  %208 = vmatpush1.msra.mxu0 0.0
  %209 = vmatprep.subr.mxu0 0.0
  %210 = vmatpush1.msra.mxu0 0.0
  %211 = vmatprep.subr.mxu0 0.0
  %212 = vmatpush1.msra.mxu0 0.0
  %213 = vmatprep.subr.mxu0 0.0
  %214 = vmatpush1.msra.mxu0 0.0
  %215 = vmatprep.subr.mxu0 0.0
  %216 = vmatpush1.msra.mxu0 0.0
  %217 = vmatprep.subr.mxu0 0.0
  %218 = vmatpush1.msra.mxu0 0.0
  %219 = vmatprep.subr.mxu0 0.0
  %220 = vmatpush1.msra.mxu0 0.0
  %221 = vmatprep.subr.mxu0 0.0
  %222 = vmatpush1.msra.mxu0 %v191
  %223 = vmatprep.subr.mxu0 0.0
  %224 = vmatpush1.msra.mxu0 %v14
  %225 = vmatprep.subr.mxu0 0.0
  %226 = vmatpush2.msra.mxu0 0.0
  %227 = vmatprep.subr.mxu0 0.0
  %228 = vmatpush2.msra.mxu0 0.0
  %229 = vmatprep.subr.mxu0 0.0
  %230 = vmatpush2.msra.mxu0 0.0
  %231 = vmatprep.subr.mxu0 0.0
  %232 = vmatpush2.msra.mxu0 0.0
  %233 = vmatprep.subr.mxu0 0.0
  %234 = vmatpush2.msra.mxu0 0.0
  %235 = vmatprep.subr.mxu0 0.0
  %236 = vmatpush2.msra.mxu0 0.0
  %237 = vmatprep.subr.mxu0 0.0
  %238 = vmatpush2.msra.mxu0 0.0
  %239 = vmatprep.subr.mxu0 0.0
  %240 = vmatpush2.msra.mxu0 0.0
  %241 = vmatprep.subr.mxu0 0.0
  %242 = vmatpush2.msra.mxu0 0.0
  %243 = vmatprep.subr.mxu0 0.0
  %244 = vmatpush2.msra.mxu0 0.0
  %245 = vmatprep.subr.mxu0 0.0
  %246 = vmatpush2.msra.mxu0 0.0
  %247 = vmatprep.subr.mxu0 0.0
  %248 = vmatpush2.msra.mxu0 0.0
  %249 = vmatprep.subr.mxu0 0.0
  %250 = vmatpush2.msra.mxu0 0.0
  %251 = vmatprep.subr.mxu0 0.0
  %252 = vmatpush2.msra.mxu0 0.0
  %253 = vmatprep.subr.mxu0 0.0
  %254 = vmatpush2.msra.mxu0 0.0
  %255 = vmatprep.subr.mxu0 0.0
  %256 = vmatpush2.msra.mxu0 0.0
  %257 = vmatprep.mubr.f32.mxu0 0.0
  %258 = vmatmul.mubr.f32.gmra.mxu0 %v61
  %v259 = vpop.f32.mrf.mxu0
  %v260 = vadd.f32 0.0, %v259
  %v261 = vpop.f32.mrf.mxu0
  %262 = vmatprep.mubr.f32.mxu0 0.0
  %263 = vmatmul.mubr.f32.gmra.mxu0 %v64
  %v264 = vpop.f32.mrf.mxu0
  %v265 = vadd.f32 0.0, %v264
  %v266 = vpop.f32.mrf.mxu0
  %267 = vmatprep.mubr.f32.mxu0 0.0
  %268 = vmatmul.mubr.f32.gmra.mxu0 %v67
  %v269 = vpop.f32.mrf.mxu0
  %v270 = vadd.f32 0.0, %v269
  %v271 = vpop.f32.mrf.mxu0
  %272 = vmatprep.mubr.f32.mxu0 0.0
  %273 = vmatmul.mubr.f32.gmra.mxu0 %v70
  %v274 = vpop.f32.mrf.mxu0
  %v275 = vadd.f32 0.0, %v274
  %v276 = vpop.f32.mrf.mxu0
  %277 = vmatprep.mubr.f32.mxu0 0.0
  %278 = vmatmul.mubr.f32.gmra.mxu0 %v73
  %v279 = vpop.f32.mrf.mxu0
  %v280 = vadd.f32 0.0, %v279
  %v281 = vpop.f32.mrf.mxu0
  %282 = vmatprep.mubr.f32.mxu0 0.0
  %283 = vmatmul.mubr.f32.gmra.mxu0 %v76
  %v284 = vpop.f32.mrf.mxu0
  %v285 = vadd.f32 0.0, %v284
  %v286 = vpop.f32.mrf.mxu0
  %287 = vmatprep.mubr.f32.mxu0 0.0
  %288 = vmatmul.mubr.f32.gmra.mxu0 %v79
  %v289 = vpop.f32.mrf.mxu0
  %v290 = vadd.f32 0.0, %v289
  %v291 = vpop.f32.mrf.mxu0
  %292 = vmatprep.mubr.f32.mxu0 0.0
  %293 = vmatmul.mubr.f32.gmra.mxu0 %v82
  %v294 = vpop.f32.mrf.mxu0
  %v295 = vadd.f32 0.0, %v294
  %v296 = vpop.f32.mrf.mxu0
  %297 = vmatprep.mubr.f32.mxu0 0.0
  %298 = vmatmul.mubr.f32.gmra.mxu0 %v85
  %v299 = vpop.f32.mrf.mxu0
  %v300 = vadd.f32 0.0, %v299
  %v301 = vpop.f32.mrf.mxu0
  %302 = vmatprep.mubr.f32.mxu0 0.0
  %303 = vmatmul.mubr.f32.gmra.mxu0 %v88
  %v304 = vpop.f32.mrf.mxu0
  %v305 = vadd.f32 0.0, %v304
  %v306 = vpop.f32.mrf.mxu0
  %307 = vmatprep.mubr.f32.mxu0 0.0
  %308 = vmatmul.mubr.f32.gmra.mxu0 %v91
  %v309 = vpop.f32.mrf.mxu0
  %v310 = vadd.f32 0.0, %v309
  %v311 = vpop.f32.mrf.mxu0
  %312 = vmatprep.mubr.f32.mxu0 0.0
  %313 = vmatmul.mubr.f32.gmra.mxu0 %v94
  %v314 = vpop.f32.mrf.mxu0
  %v315 = vadd.f32 0.0, %v314
  %v316 = vpop.f32.mrf.mxu0
  %317 = vmatprep.mubr.f32.mxu0 0.0
  %318 = vmatmul.mubr.f32.gmra.mxu0 %v97
  %v319 = vpop.f32.mrf.mxu0
  %v320 = vadd.f32 0.0, %v319
  %v321 = vpop.f32.mrf.mxu0
  %322 = vmatprep.mubr.f32.mxu0 0.0
  %323 = vmatmul.mubr.f32.gmra.mxu0 %v100
  %v324 = vpop.f32.mrf.mxu0
  %v325 = vadd.f32 0.0, %v324
  %v326 = vpop.f32.mrf.mxu0
  %327 = vmatprep.mubr.f32.mxu0 0.0
  %328 = vmatmul.mubr.f32.gmra.mxu0 %v103
  %v329 = vpop.f32.mrf.mxu0
  %v330 = vadd.f32 0.0, %v329
  %v331 = vpop.f32.mrf.mxu0
  %332 = vmatprep.mubr.f32.mxu0 0.0
  %333 = vmatmul.mubr.f32.gmra.mxu0 %v106
  %v334 = vpop.f32.mrf.mxu0
  %v335 = vadd.f32 0.0, %v334
  %v336 = vpop.f32.mrf.mxu0
  %337 = vmatprep.mubr.f32.mxu0 0.0
  %338 = vmatmul.mubr.f32.gmra.mxu0 %v109
  %v339 = vpop.f32.mrf.mxu0
  %v340 = vadd.f32 0.0, %v339
  %v341 = vpop.f32.mrf.mxu0
  %342 = vmatprep.mubr.f32.mxu0 0.0
  %343 = vmatmul.mubr.f32.gmra.mxu0 %v112
  %v344 = vpop.f32.mrf.mxu0
  %v345 = vadd.f32 0.0, %v344
  %v346 = vpop.f32.mrf.mxu0
  %347 = vmatprep.mubr.f32.mxu0 0.0
  %348 = vmatmul.mubr.f32.gmra.mxu0 %v115
  %v349 = vpop.f32.mrf.mxu0
  %v350 = vadd.f32 0.0, %v349
  %v351 = vpop.f32.mrf.mxu0
  %352 = vmatprep.mubr.f32.mxu0 0.0
  %353 = vmatmul.mubr.f32.gmra.mxu0 %v118
  %v354 = vpop.f32.mrf.mxu0
  %v355 = vadd.f32 0.0, %v354
  %v356 = vpop.f32.mrf.mxu0
  %357 = vmatprep.mubr.f32.mxu0 0.0
  %358 = vmatmul.mubr.f32.gmra.mxu0 %v121
  %v359 = vpop.f32.mrf.mxu0
  %v360 = vadd.f32 0.0, %v359
  %v361 = vpop.f32.mrf.mxu0
  %362 = vmatprep.mubr.f32.mxu0 0.0
  %363 = vmatmul.mubr.f32.gmra.mxu0 %v124
  %v364 = vpop.f32.mrf.mxu0
  %v365 = vadd.f32 0.0, %v364
  %v366 = vpop.f32.mrf.mxu0
  %367 = vmatprep.mubr.f32.mxu0 0.0
  %368 = vmatmul.mubr.f32.gmra.mxu0 %v127
  %v369 = vpop.f32.mrf.mxu0
  %v370 = vadd.f32 0.0, %v369
  %v371 = vpop.f32.mrf.mxu0
  %372 = vmatprep.mubr.f32.mxu0 0.0
  %373 = vmatmul.mubr.f32.gmra.mxu0 %v130
  %v374 = vpop.f32.mrf.mxu0
  %v375 = vadd.f32 0.0, %v374
  %v376 = vpop.f32.mrf.mxu0
  %377 = vmatprep.mubr.f32.mxu0 0.0
  %378 = vmatmul.mubr.f32.gmra.mxu0 %v133
  %v379 = vpop.f32.mrf.mxu0
  %v380 = vadd.f32 0.0, %v379
  %v381 = vpop.f32.mrf.mxu0
  %382 = vmatprep.mubr.f32.mxu0 0.0
  %383 = vmatmul.mubr.f32.gmra.mxu0 %v136
  %v384 = vpop.f32.mrf.mxu0
  %v385 = vadd.f32 0.0, %v384
  %v386 = vpop.f32.mrf.mxu0
  %387 = vmatprep.mubr.f32.mxu0 0.0
  %388 = vmatmul.mubr.f32.gmra.mxu0 %v139
  %v389 = vpop.f32.mrf.mxu0
  %v390 = vadd.f32 0.0, %v389
  %v391 = vpop.f32.mrf.mxu0
  %392 = vmatprep.mubr.f32.mxu0 0.0
  %393 = vmatmul.mubr.f32.gmra.mxu0 %v142
  %v394 = vpop.f32.mrf.mxu0
  %v395 = vadd.f32 0.0, %v394
  %v396 = vpop.f32.mrf.mxu0
  %397 = vmatprep.mubr.f32.mxu0 0.0
  %398 = vmatmul.mubr.f32.gmra.mxu0 %v145
  %v399 = vpop.f32.mrf.mxu0
  %v400 = vadd.f32 0.0, %v399
  %v401 = vpop.f32.mrf.mxu0
  %402 = vmatprep.mubr.f32.mxu0 0.0
  %403 = vmatmul.mubr.f32.gmra.mxu0 %v148
  %v404 = vpop.f32.mrf.mxu0
  %v405 = vadd.f32 0.0, %v404
  %v406 = vpop.f32.mrf.mxu0
  %407 = vmatprep.mubr.f32.mxu0 0.0
  %408 = vmatmul.mubr.f32.gmra.mxu0 %v151
  %v409 = vpop.f32.mrf.mxu0
  %v410 = vadd.f32 0.0, %v409
  %v411 = vpop.f32.mrf.mxu0
  %412 = vmatprep.mubr.f32.mxu0 0.0
  %413 = vmatmul.mubr.f32.gmra.mxu0 %v154
  %v414 = vpop.f32.mrf.mxu0
  %v415 = vadd.f32 0.0, %v414
  %v416 = vpop.f32.mrf.mxu0
  %417 = vmatprep.mubr.f32.mxu0 0.0
  %418 = vmatmul.mubr.f32.gmra.mxu0 %v157
  %v419 = vpop.f32.mrf.mxu0
  %v420 = vadd.f32 0.0, %v419
  %v421 = vpop.f32.mrf.mxu0
  %422 = vmatprep.mubr.f32.mxu0 0.0
  %423 = vmatmul.mubr.f32.gmra.mxu0 %v160
  %v424 = vpop.f32.mrf.mxu0
  %v425 = vadd.f32 0.0, %v424
  %v426 = vpop.f32.mrf.mxu0
  %427 = vmatprep.mubr.f32.mxu0 0.0
  %428 = vmatmul.mubr.f32.gmra.mxu0 %v163
  %v429 = vpop.f32.mrf.mxu0
  %v430 = vadd.f32 0.0, %v429
  %v431 = vpop.f32.mrf.mxu0
  %432 = vmatprep.mubr.f32.mxu0 0.0
  %433 = vmatmul.mubr.f32.gmra.mxu0 %v166
  %v434 = vpop.f32.mrf.mxu0
  %v435 = vadd.f32 0.0, %v434
  %v436 = vpop.f32.mrf.mxu0
  %437 = vmatprep.mubr.f32.mxu0 0.0
  %438 = vmatmul.mubr.f32.gmra.mxu0 %v169
  %v439 = vpop.f32.mrf.mxu0
  %v440 = vadd.f32 0.0, %v439
  %v441 = vpop.f32.mrf.mxu0
  %442 = vmatprep.mubr.f32.mxu0 0.0
  %443 = vmatmul.mubr.f32.gmra.mxu0 %v172
  %v444 = vpop.f32.mrf.mxu0
  %v445 = vadd.f32 0.0, %v444
  %v446 = vpop.f32.mrf.mxu0
  %447 = vmatprep.mubr.f32.mxu0 0.0
  %448 = vmatmul.mubr.f32.gmra.mxu0 %v175
  %v449 = vpop.f32.mrf.mxu0
  %v450 = vadd.f32 0.0, %v449
  %v451 = vpop.f32.mrf.mxu0
  %452 = vmatprep.mubr.f32.mxu0 0.0
  %453 = vmatmul.mubr.f32.gmra.mxu0 %v178
  %v454 = vpop.f32.mrf.mxu0
  %v455 = vadd.f32 0.0, %v454
  %v456 = vpop.f32.mrf.mxu0
  %457 = vmatprep.mubr.f32.mxu0 0.0
  %458 = vmatmul.mubr.f32.gmra.mxu0 %v181
  %v459 = vpop.f32.mrf.mxu0
  %v460 = vadd.f32 0.0, %v459
  %v461 = vpop.f32.mrf.mxu0
  %462 = vmatprep.mubr.f32.mxu0 0.0
  %463 = vmatmul.mubr.f32.gmra.mxu0 %v184
  %v464 = vpop.f32.mrf.mxu0
  %v465 = vadd.f32 0.0, %v464
  %v466 = vpop.f32.mrf.mxu0
  %467 = vmatprep.mubr.f32.mxu0 0.0
  %468 = vmatmul.mubr.f32.gmra.mxu0 %v187
  %v469 = vpop.f32.mrf.mxu0
  %v470 = vadd.f32 0.0, %v469
  %v471 = vpop.f32.mrf.mxu0
  %472 = vdwg.mxu0
  %s473 = scalar_lea.vmem %s0, 344
  %v474 = vld [vmem:[%s473] sm:$0xff]
  %v475 = vld [vmem:[%s473 + $0x8] sm:$0xff]
  %v476 = vld [vmem:[%s473 + $0x10] sm:$0xff]
  %v477 = vld [vmem:[%s473 + $0x18] sm:$0xff]
  %v478 = vld [vmem:[%s473 + $0x20] sm:$0xff]
  %v479 = vld [vmem:[%s473 + $0x28] sm:$0xff]
  %v480 = vld [vmem:[%s473 + $0x30] sm:$0xff]
  %v481 = vld [vmem:[%s473 + $0x38] sm:$0xff]
  %v482 = vld [vmem:[%s473 + $0x40] sm:$0xff]
  %v483 = vld [vmem:[%s473 + $0x48] sm:$0xff]
  %v484 = vld [vmem:[%s473 + $0x50] sm:$0xff]
  %v485 = vld [vmem:[%s473 + $0x58] sm:$0xff]
  %v486 = vld [vmem:[%s473 + $0x60] sm:$0xff]
  %v487 = vld [vmem:[%s473 + $0x68] sm:$0xff]
  %v488 = vld [vmem:[%s473 + $0x70] sm:$0xff]
  %v489 = vld [vmem:[%s473 + $0x78] sm:$0xff]
  %v490 = vld [vmem:[%s473 + $0x80] sm:$0xff]
  %v491 = vld [vmem:[%s473 + $0x88] sm:$0xff]
  %v492 = vld [vmem:[%s473 + $0x90] sm:$0xff]
  %v493 = vld [vmem:[%s473 + $0x98] sm:$0xff]
  %v494 = vld [vmem:[%s473 + $0xa0] sm:$0xff]
  %v495 = vld [vmem:[%s473 + $0xa8] sm:$0xff]
  %v496 = vld [vmem:[%s473 + $0xb0] sm:$0xff]
  %v497 = vld [vmem:[%s473 + $0xb8] sm:$0xff]
  %v498 = vld [vmem:[%s473 + $0xc0] sm:$0xff]
  %v499 = vld [vmem:[%s473 + $0xc8] sm:$0xff]
  %v500 = vld [vmem:[%s473 + $0xd0] sm:$0xff]
  %v501 = vld [vmem:[%s473 + $0xd8] sm:$0xff]
  %v502 = vld [vmem:[%s473 + $0xe0] sm:$0xff]
  %v503 = vld [vmem:[%s473 + $0xe8] sm:$0xff]
  %v504 = vld [vmem:[%s473 + $0xf0] sm:$0xff]
  %v505 = vld [vmem:[%s473 + $0xf8] sm:$0xff]
  %v506 = vld [vmem:[%s473 + $0x100] sm:$0xff]
  %v507 = vld [vmem:[%s473 + $0x108] sm:$0xff]
  %v508 = vld [vmem:[%s473 + $0x110] sm:$0xff]
  %v509 = vld [vmem:[%s473 + $0x118] sm:$0xff]
  %v510 = vld [vmem:[%s473 + $0x120] sm:$0xff]
  %v511 = vld [vmem:[%s473 + $0x128] sm:$0xff]
  %v512 = vld [vmem:[%s473 + $0x130] sm:$0xff]
  %v513 = vld [vmem:[%s473 + $0x138] sm:$0xff]
  %v514 = vld [vmem:[%s473 + $0x140] sm:$0xff]
  %v515 = vld [vmem:[%s473 + $0x148] sm:$0xff]
  %v516 = vld [vmem:[%s473 + $0x150] sm:$0x3]
  %v518 = vsel %vm59, %v474, 0
  %v521 = vsel %vm59, %v475, 0
  %v524 = vsel %vm59, %v476, 0
  %v527 = vsel %vm59, %v477, 0
  %v530 = vsel %vm59, %v478, 0
  %v533 = vsel %vm59, %v479, 0
  %v536 = vsel %vm59, %v480, 0
  %v539 = vsel %vm59, %v481, 0
  %v542 = vsel %vm59, %v482, 0
  %v545 = vsel %vm59, %v483, 0
  %v548 = vsel %vm59, %v484, 0
  %v551 = vsel %vm59, %v485, 0
  %v554 = vsel %vm59, %v486, 0
  %v557 = vsel %vm59, %v487, 0
  %v560 = vsel %vm59, %v488, 0
  %v563 = vsel %vm59, %v489, 0
  %v566 = vsel %vm59, %v490, 0
  %v569 = vsel %vm59, %v491, 0
  %v572 = vsel %vm59, %v492, 0
  %v575 = vsel %vm59, %v493, 0
  %v578 = vsel %vm59, %v494, 0
  %v581 = vsel %vm59, %v495, 0
  %v584 = vsel %vm59, %v496, 0
  %v587 = vsel %vm59, %v497, 0
  %v590 = vsel %vm59, %v498, 0
  %v593 = vsel %vm59, %v499, 0
  %v596 = vsel %vm59, %v500, 0
  %v599 = vsel %vm59, %v501, 0
  %v602 = vsel %vm59, %v502, 0
  %v605 = vsel %vm59, %v503, 0
  %v608 = vsel %vm59, %v504, 0
  %v611 = vsel %vm59, %v505, 0
  %v614 = vsel %vm59, %v506, 0
  %v617 = vsel %vm59, %v507, 0
  %v620 = vsel %vm59, %v508, 0
  %v623 = vsel %vm59, %v509, 0
  %v626 = vsel %vm59, %v510, 0
  %v629 = vsel %vm59, %v511, 0
  %v632 = vsel %vm59, %v512, 0
  %v635 = vsel %vm59, %v513, 0
  %v638 = vsel %vm59, %v514, 0
  %v641 = vsel %vm59, %v515, 0
  %v644 = vsel %vm59, %v516, 0
  %646 = vmatprep.subr.mxu0 0.0
  %647 = vmatpush1.msra.mxu0 0.0
  %648 = vmatprep.subr.mxu0 0.0
  %649 = vmatpush1.msra.mxu0 0.0
  %650 = vmatprep.subr.mxu0 0.0
  %651 = vmatpush1.msra.mxu0 0.0
  %652 = vmatprep.subr.mxu0 0.0
  %653 = vmatpush1.msra.mxu0 0.0
  %654 = vmatprep.subr.mxu0 0.0
  %655 = vmatpush1.msra.mxu0 0.0
  %656 = vmatprep.subr.mxu0 0.0
  %657 = vmatpush1.msra.mxu0 0.0
  %658 = vmatprep.subr.mxu0 0.0
  %659 = vmatpush1.msra.mxu0 0.0
  %660 = vmatprep.subr.mxu0 0.0
  %661 = vmatpush1.msra.mxu0 0.0
  %662 = vmatprep.subr.mxu0 0.0
  %663 = vmatpush1.msra.mxu0 0.0
  %664 = vmatprep.subr.mxu0 0.0
  %665 = vmatpush1.msra.mxu0 0.0
  %666 = vmatprep.subr.mxu0 0.0
  %667 = vmatpush1.msra.mxu0 0.0
  %668 = vmatprep.subr.mxu0 0.0
  %669 = vmatpush1.msra.mxu0 0.0
  %670 = vmatprep.subr.mxu0 0.0
  %671 = vmatpush1.msra.mxu0 0.0
  %672 = vmatprep.subr.mxu0 0.0
  %673 = vmatpush1.msra.mxu0 0.0
  %674 = vmatprep.subr.mxu0 0.0
  %675 = vmatpush1.msra.mxu0 %v191
  %676 = vmatprep.subr.mxu0 0.0
  %677 = vmatpush1.msra.mxu0 %v14
  %678 = vmatprep.subr.mxu0 0.0
  %679 = vmatpush2.msra.mxu0 0.0
  %680 = vmatprep.subr.mxu0 0.0
  %681 = vmatpush2.msra.mxu0 0.0
  %682 = vmatprep.subr.mxu0 0.0
  %683 = vmatpush2.msra.mxu0 0.0
  %684 = vmatprep.subr.mxu0 0.0
  %685 = vmatpush2.msra.mxu0 0.0
  %686 = vmatprep.subr.mxu0 0.0
  %687 = vmatpush2.msra.mxu0 0.0
  %688 = vmatprep.subr.mxu0 0.0
  %689 = vmatpush2.msra.mxu0 0.0
  %690 = vmatprep.subr.mxu0 0.0
  %691 = vmatpush2.msra.mxu0 0.0
  %692 = vmatprep.subr.mxu0 0.0
  %693 = vmatpush2.msra.mxu0 0.0
  %694 = vmatprep.subr.mxu0 0.0
  %695 = vmatpush2.msra.mxu0 0.0
  %696 = vmatprep.subr.mxu0 0.0
  %697 = vmatpush2.msra.mxu0 0.0
  %698 = vmatprep.subr.mxu0 0.0
  %699 = vmatpush2.msra.mxu0 0.0
  %700 = vmatprep.subr.mxu0 0.0
  %701 = vmatpush2.msra.mxu0 0.0
  %702 = vmatprep.subr.mxu0 0.0
  %703 = vmatpush2.msra.mxu0 0.0
  %704 = vmatprep.subr.mxu0 0.0
  %705 = vmatpush2.msra.mxu0 0.0
  %706 = vmatprep.subr.mxu0 0.0
  %707 = vmatpush2.msra.mxu0 0.0
  %708 = vmatprep.subr.mxu0 0.0
  %709 = vmatpush2.msra.mxu0 0.0
  %710 = vmatprep.mubr.f32.mxu0 0.0
  %711 = vmatmul.mubr.f32.gmra.mxu0 %v518
  %v712 = vpop.f32.mrf.mxu0
  %v713 = vadd.f32 0.0, %v712
  %v714 = vpop.f32.mrf.mxu0
  %715 = vmatprep.mubr.f32.mxu0 0.0
  %716 = vmatmul.mubr.f32.gmra.mxu0 %v521
  %v717 = vpop.f32.mrf.mxu0
  %v718 = vadd.f32 0.0, %v717
  %v719 = vpop.f32.mrf.mxu0
  %720 = vmatprep.mubr.f32.mxu0 0.0
  %721 = vmatmul.mubr.f32.gmra.mxu0 %v524
  %v722 = vpop.f32.mrf.mxu0
  %v723 = vadd.f32 0.0, %v722
  %v724 = vpop.f32.mrf.mxu0
  %725 = vmatprep.mubr.f32.mxu0 0.0
  %726 = vmatmul.mubr.f32.gmra.mxu0 %v527
  %v727 = vpop.f32.mrf.mxu0
  %v728 = vadd.f32 0.0, %v727
  %v729 = vpop.f32.mrf.mxu0
  %730 = vmatprep.mubr.f32.mxu0 0.0
  %731 = vmatmul.mubr.f32.gmra.mxu0 %v530
  %v732 = vpop.f32.mrf.mxu0
  %v733 = vadd.f32 0.0, %v732
  %v734 = vpop.f32.mrf.mxu0
  %735 = vmatprep.mubr.f32.mxu0 0.0
  %736 = vmatmul.mubr.f32.gmra.mxu0 %v533
  %v737 = vpop.f32.mrf.mxu0
  %v738 = vadd.f32 0.0, %v737
  %v739 = vpop.f32.mrf.mxu0
  %740 = vmatprep.mubr.f32.mxu0 0.0
  %741 = vmatmul.mubr.f32.gmra.mxu0 %v536
  %v742 = vpop.f32.mrf.mxu0
  %v743 = vadd.f32 0.0, %v742
  %v744 = vpop.f32.mrf.mxu0
  %745 = vmatprep.mubr.f32.mxu0 0.0
  %746 = vmatmul.mubr.f32.gmra.mxu0 %v539
  %v747 = vpop.f32.mrf.mxu0
  %v748 = vadd.f32 0.0, %v747
  %v749 = vpop.f32.mrf.mxu0
  %750 = vmatprep.mubr.f32.mxu0 0.0
  %751 = vmatmul.mubr.f32.gmra.mxu0 %v542
  %v752 = vpop.f32.mrf.mxu0
  %v753 = vadd.f32 0.0, %v752
  %v754 = vpop.f32.mrf.mxu0
  %755 = vmatprep.mubr.f32.mxu0 0.0
  %756 = vmatmul.mubr.f32.gmra.mxu0 %v545
  %v757 = vpop.f32.mrf.mxu0
  %v758 = vadd.f32 0.0, %v757
  %v759 = vpop.f32.mrf.mxu0
  %760 = vmatprep.mubr.f32.mxu0 0.0
  %761 = vmatmul.mubr.f32.gmra.mxu0 %v548
  %v762 = vpop.f32.mrf.mxu0
  %v763 = vadd.f32 0.0, %v762
  %v764 = vpop.f32.mrf.mxu0
  %765 = vmatprep.mubr.f32.mxu0 0.0
  %766 = vmatmul.mubr.f32.gmra.mxu0 %v551
  %v767 = vpop.f32.mrf.mxu0
  %v768 = vadd.f32 0.0, %v767
  %v769 = vpop.f32.mrf.mxu0
  %770 = vmatprep.mubr.f32.mxu0 0.0
  %771 = vmatmul.mubr.f32.gmra.mxu0 %v554
  %v772 = vpop.f32.mrf.mxu0
  %v773 = vadd.f32 0.0, %v772
  %v774 = vpop.f32.mrf.mxu0
  %775 = vmatprep.mubr.f32.mxu0 0.0
  %776 = vmatmul.mubr.f32.gmra.mxu0 %v557
  %v777 = vpop.f32.mrf.mxu0
  %v778 = vadd.f32 0.0, %v777
  %v779 = vpop.f32.mrf.mxu0
  %780 = vmatprep.mubr.f32.mxu0 0.0
  %781 = vmatmul.mubr.f32.gmra.mxu0 %v560
  %v782 = vpop.f32.mrf.mxu0
  %v783 = vadd.f32 0.0, %v782
  %v784 = vpop.f32.mrf.mxu0
  %785 = vmatprep.mubr.f32.mxu0 0.0
  %786 = vmatmul.mubr.f32.gmra.mxu0 %v563
  %v787 = vpop.f32.mrf.mxu0
  %v788 = vadd.f32 0.0, %v787
  %v789 = vpop.f32.mrf.mxu0
  %790 = vmatprep.mubr.f32.mxu0 0.0
  %791 = vmatmul.mubr.f32.gmra.mxu0 %v566
  %v792 = vpop.f32.mrf.mxu0
  %v793 = vadd.f32 0.0, %v792
  %v794 = vpop.f32.mrf.mxu0
  %795 = vmatprep.mubr.f32.mxu0 0.0
  %796 = vmatmul.mubr.f32.gmra.mxu0 %v569
  %v797 = vpop.f32.mrf.mxu0
  %v798 = vadd.f32 0.0, %v797
  %v799 = vpop.f32.mrf.mxu0
  %800 = vmatprep.mubr.f32.mxu0 0.0
  %801 = vmatmul.mubr.f32.gmra.mxu0 %v572
  %v802 = vpop.f32.mrf.mxu0
  %v803 = vadd.f32 0.0, %v802
  %v804 = vpop.f32.mrf.mxu0
  %805 = vmatprep.mubr.f32.mxu0 0.0
  %806 = vmatmul.mubr.f32.gmra.mxu0 %v575
  %v807 = vpop.f32.mrf.mxu0
  %v808 = vadd.f32 0.0, %v807
  %v809 = vpop.f32.mrf.mxu0
  %810 = vmatprep.mubr.f32.mxu0 0.0
  %811 = vmatmul.mubr.f32.gmra.mxu0 %v578
  %v812 = vpop.f32.mrf.mxu0
  %v813 = vadd.f32 0.0, %v812
  %v814 = vpop.f32.mrf.mxu0
  %815 = vmatprep.mubr.f32.mxu0 0.0
  %816 = vmatmul.mubr.f32.gmra.mxu0 %v581
  %v817 = vpop.f32.mrf.mxu0
  %v818 = vadd.f32 0.0, %v817
  %v819 = vpop.f32.mrf.mxu0
  %820 = vmatprep.mubr.f32.mxu0 0.0
  %821 = vmatmul.mubr.f32.gmra.mxu0 %v584
  %v822 = vpop.f32.mrf.mxu0
  %v823 = vadd.f32 0.0, %v822
  %v824 = vpop.f32.mrf.mxu0
  %825 = vmatprep.mubr.f32.mxu0 0.0
  %826 = vmatmul.mubr.f32.gmra.mxu0 %v587
  %v827 = vpop.f32.mrf.mxu0
  %v828 = vadd.f32 0.0, %v827
  %v829 = vpop.f32.mrf.mxu0
  %830 = vmatprep.mubr.f32.mxu0 0.0
  %831 = vmatmul.mubr.f32.gmra.mxu0 %v590
  %v832 = vpop.f32.mrf.mxu0
  %v833 = vadd.f32 0.0, %v832
  %v834 = vpop.f32.mrf.mxu0
  %835 = vmatprep.mubr.f32.mxu0 0.0
  %836 = vmatmul.mubr.f32.gmra.mxu0 %v593
  %v837 = vpop.f32.mrf.mxu0
  %v838 = vadd.f32 0.0, %v837
  %v839 = vpop.f32.mrf.mxu0
  %840 = vmatprep.mubr.f32.mxu0 0.0
  %841 = vmatmul.mubr.f32.gmra.mxu0 %v596
  %v842 = vpop.f32.mrf.mxu0
  %v843 = vadd.f32 0.0, %v842
  %v844 = vpop.f32.mrf.mxu0
  %845 = vmatprep.mubr.f32.mxu0 0.0
  %846 = vmatmul.mubr.f32.gmra.mxu0 %v599
  %v847 = vpop.f32.mrf.mxu0
  %v848 = vadd.f32 0.0, %v847
  %v849 = vpop.f32.mrf.mxu0
  %850 = vmatprep.mubr.f32.mxu0 0.0
  %851 = vmatmul.mubr.f32.gmra.mxu0 %v602
  %v852 = vpop.f32.mrf.mxu0
  %v853 = vadd.f32 0.0, %v852
  %v854 = vpop.f32.mrf.mxu0
  %855 = vmatprep.mubr.f32.mxu0 0.0
  %856 = vmatmul.mubr.f32.gmra.mxu0 %v605
  %v857 = vpop.f32.mrf.mxu0
  %v858 = vadd.f32 0.0, %v857
  %v859 = vpop.f32.mrf.mxu0
  %860 = vmatprep.mubr.f32.mxu0 0.0
  %861 = vmatmul.mubr.f32.gmra.mxu0 %v608
  %v862 = vpop.f32.mrf.mxu0
  %v863 = vadd.f32 0.0, %v862
  %v864 = vpop.f32.mrf.mxu0
  %865 = vmatprep.mubr.f32.mxu0 0.0
  %866 = vmatmul.mubr.f32.gmra.mxu0 %v611
  %v867 = vpop.f32.mrf.mxu0
  %v868 = vadd.f32 0.0, %v867
  %v869 = vpop.f32.mrf.mxu0
  %870 = vmatprep.mubr.f32.mxu0 0.0
  %871 = vmatmul.mubr.f32.gmra.mxu0 %v614
  %v872 = vpop.f32.mrf.mxu0
  %v873 = vadd.f32 0.0, %v872
  %v874 = vpop.f32.mrf.mxu0
  %875 = vmatprep.mubr.f32.mxu0 0.0
  %876 = vmatmul.mubr.f32.gmra.mxu0 %v617
  %v877 = vpop.f32.mrf.mxu0
  %v878 = vadd.f32 0.0, %v877
  %v879 = vpop.f32.mrf.mxu0
  %880 = vmatprep.mubr.f32.mxu0 0.0
  %881 = vmatmul.mubr.f32.gmra.mxu0 %v620
  %v882 = vpop.f32.mrf.mxu0
  %v883 = vadd.f32 0.0, %v882
  %v884 = vpop.f32.mrf.mxu0
  %885 = vmatprep.mubr.f32.mxu0 0.0
  %886 = vmatmul.mubr.f32.gmra.mxu0 %v623
  %v887 = vpop.f32.mrf.mxu0
  %v888 = vadd.f32 0.0, %v887
  %v889 = vpop.f32.mrf.mxu0
  %890 = vmatprep.mubr.f32.mxu0 0.0
  %891 = vmatmul.mubr.f32.gmra.mxu0 %v626
  %v892 = vpop.f32.mrf.mxu0
  %v893 = vadd.f32 0.0, %v892
  %v894 = vpop.f32.mrf.mxu0
  %895 = vmatprep.mubr.f32.mxu0 0.0
  %896 = vmatmul.mubr.f32.gmra.mxu0 %v629
  %v897 = vpop.f32.mrf.mxu0
  %v898 = vadd.f32 0.0, %v897
  %v899 = vpop.f32.mrf.mxu0
  %900 = vmatprep.mubr.f32.mxu0 0.0
  %901 = vmatmul.mubr.f32.gmra.mxu0 %v632
  %v902 = vpop.f32.mrf.mxu0
  %v903 = vadd.f32 0.0, %v902
  %v904 = vpop.f32.mrf.mxu0
  %905 = vmatprep.mubr.f32.mxu0 0.0
  %906 = vmatmul.mubr.f32.gmra.mxu0 %v635
  %v907 = vpop.f32.mrf.mxu0
  %v908 = vadd.f32 0.0, %v907
  %v909 = vpop.f32.mrf.mxu0
  %910 = vmatprep.mubr.f32.mxu0 0.0
  %911 = vmatmul.mubr.f32.gmra.mxu0 %v638
  %v912 = vpop.f32.mrf.mxu0
  %v913 = vadd.f32 0.0, %v912
  %v914 = vpop.f32.mrf.mxu0
  %915 = vmatprep.mubr.f32.mxu0 0.0
  %916 = vmatmul.mubr.f32.gmra.mxu0 %v641
  %v917 = vpop.f32.mrf.mxu0
  %v918 = vadd.f32 0.0, %v917
  %v919 = vpop.f32.mrf.mxu0
  %920 = vmatprep.mubr.f32.mxu0 0.0
  %921 = vmatmul.mubr.f32.gmra.mxu0 %v644
  %v922 = vpop.f32.mrf.mxu0
  %v923 = vadd.f32 0.0, %v922
  %v924 = vpop.f32.mrf.mxu0
  %925 = vdwg.mxu0
  %v926 = vmax.f32 %v260, %v713
  %v927 = vmax.f32 %v265, %v718
  %v928 = vmax.f32 %v270, %v723
  %v929 = vmax.f32 %v275, %v728
  %v930 = vmax.f32 %v280, %v733
  %v931 = vmax.f32 %v285, %v738
  %v932 = vmax.f32 %v290, %v743
  %v933 = vmax.f32 %v295, %v748
  %v934 = vmax.f32 %v300, %v753
  %v935 = vmax.f32 %v305, %v758
  %v936 = vmax.f32 %v310, %v763
  %v937 = vmax.f32 %v315, %v768
  %v938 = vmax.f32 %v320, %v773
  %v939 = vmax.f32 %v325, %v778
  %v940 = vmax.f32 %v330, %v783
  %v941 = vmax.f32 %v335, %v788
  %v942 = vmax.f32 %v340, %v793
  %v943 = vmax.f32 %v345, %v798
  %v944 = vmax.f32 %v350, %v803
  %v945 = vmax.f32 %v355, %v808
  %v946 = vmax.f32 %v360, %v813
  %v947 = vmax.f32 %v365, %v818
  %v948 = vmax.f32 %v370, %v823
  %v949 = vmax.f32 %v375, %v828
  %v950 = vmax.f32 %v380, %v833
  %v951 = vmax.f32 %v385, %v838
  %v952 = vmax.f32 %v390, %v843
  %v953 = vmax.f32 %v395, %v848
  %v954 = vmax.f32 %v400, %v853
  %v955 = vmax.f32 %v405, %v858
  %v956 = vmax.f32 %v410, %v863
  %v957 = vmax.f32 %v415, %v868
  %v958 = vmax.f32 %v420, %v873
  %v959 = vmax.f32 %v425, %v878
  %v960 = vmax.f32 %v430, %v883
  %v961 = vmax.f32 %v435, %v888
  %v962 = vmax.f32 %v440, %v893
  %v963 = vmax.f32 %v445, %v898
  %v964 = vmax.f32 %v450, %v903
  %v965 = vmax.f32 %v455, %v908
  %v966 = vmax.f32 %v460, %v913
  %v967 = vmax.f32 %v465, %v918
  %v968 = vmax.f32 %v470, %v923
  %s969 = scalar_lea.vmem %s0, 688
  %v970 = vld [vmem:[%s969] sm:$0xff]
  %v971 = vld [vmem:[%s969 + $0x8] sm:$0xff]
  %v972 = vld [vmem:[%s969 + $0x10] sm:$0xff]
  %v973 = vld [vmem:[%s969 + $0x18] sm:$0xff]
  %v974 = vld [vmem:[%s969 + $0x20] sm:$0xff]
  %v975 = vld [vmem:[%s969 + $0x28] sm:$0xff]
  %v976 = vld [vmem:[%s969 + $0x30] sm:$0xff]
  %v977 = vld [vmem:[%s969 + $0x38] sm:$0xff]
  %v978 = vld [vmem:[%s969 + $0x40] sm:$0xff]
  %v979 = vld [vmem:[%s969 + $0x48] sm:$0xff]
  %v980 = vld [vmem:[%s969 + $0x50] sm:$0xff]
  %v981 = vld [vmem:[%s969 + $0x58] sm:$0xff]
  %v982 = vld [vmem:[%s969 + $0x60] sm:$0xff]
  %v983 = vld [vmem:[%s969 + $0x68] sm:$0xff]
  %v984 = vld [vmem:[%s969 + $0x70] sm:$0xff]
  %v985 = vld [vmem:[%s969 + $0x78] sm:$0xff]
  %v986 = vld [vmem:[%s969 + $0x80] sm:$0xff]
  %v987 = vld [vmem:[%s969 + $0x88] sm:$0xff]
  %v988 = vld [vmem:[%s969 + $0x90] sm:$0xff]
  %v989 = vld [vmem:[%s969 + $0x98] sm:$0xff]
  %v990 = vld [vmem:[%s969 + $0xa0] sm:$0xff]
  %v991 = vld [vmem:[%s969 + $0xa8] sm:$0xff]
  %v992 = vld [vmem:[%s969 + $0xb0] sm:$0xff]
  %v993 = vld [vmem:[%s969 + $0xb8] sm:$0xff]
  %v994 = vld [vmem:[%s969 + $0xc0] sm:$0xff]
  %v995 = vld [vmem:[%s969 + $0xc8] sm:$0xff]
  %v996 = vld [vmem:[%s969 + $0xd0] sm:$0xff]
  %v997 = vld [vmem:[%s969 + $0xd8] sm:$0xff]
  %v998 = vld [vmem:[%s969 + $0xe0] sm:$0xff]
  %v999 = vld [vmem:[%s969 + $0xe8] sm:$0xff]
  %v1000 = vld [vmem:[%s969 + $0xf0] sm:$0xff]
  %v1001 = vld [vmem:[%s969 + $0xf8] sm:$0xff]
  %v1002 = vld [vmem:[%s969 + $0x100] sm:$0xff]
  %v1003 = vld [vmem:[%s969 + $0x108] sm:$0xff]
  %v1004 = vld [vmem:[%s969 + $0x110] sm:$0xff]
  %v1005 = vld [vmem:[%s969 + $0x118] sm:$0xff]
  %v1006 = vld [vmem:[%s969 + $0x120] sm:$0xff]
  %v1007 = vld [vmem:[%s969 + $0x128] sm:$0xff]
  %v1008 = vld [vmem:[%s969 + $0x130] sm:$0xff]
  %v1009 = vld [vmem:[%s969 + $0x138] sm:$0xff]
  %v1010 = vld [vmem:[%s969 + $0x140] sm:$0xff]
  %v1011 = vld [vmem:[%s969 + $0x148] sm:$0xff]
  %v1012 = vld [vmem:[%s969 + $0x150] sm:$0x3]
  %v1014 = vsel %vm59, %v970, 0
  %v1017 = vsel %vm59, %v971, 0
  %v1020 = vsel %vm59, %v972, 0
  %v1023 = vsel %vm59, %v973, 0
  %v1026 = vsel %vm59, %v974, 0
  %v1029 = vsel %vm59, %v975, 0
  %v1032 = vsel %vm59, %v976, 0
  %v1035 = vsel %vm59, %v977, 0
  %v1038 = vsel %vm59, %v978, 0
  %v1041 = vsel %vm59, %v979, 0
  %v1044 = vsel %vm59, %v980, 0
  %v1047 = vsel %vm59, %v981, 0
  %v1050 = vsel %vm59, %v982, 0
  %v1053 = vsel %vm59, %v983, 0
  %v1056 = vsel %vm59, %v984, 0
  %v1059 = vsel %vm59, %v985, 0
  %v1062 = vsel %vm59, %v986, 0
  %v1065 = vsel %vm59, %v987, 0
  %v1068 = vsel %vm59, %v988, 0
  %v1071 = vsel %vm59, %v989, 0
  %v1074 = vsel %vm59, %v990, 0
  %v1077 = vsel %vm59, %v991, 0
  %v1080 = vsel %vm59, %v992, 0
  %v1083 = vsel %vm59, %v993, 0
  %v1086 = vsel %vm59, %v994, 0
  %v1089 = vsel %vm59, %v995, 0
  %v1092 = vsel %vm59, %v996, 0
  %v1095 = vsel %vm59, %v997, 0
  %v1098 = vsel %vm59, %v998, 0
  %v1101 = vsel %vm59, %v999, 0
  %v1104 = vsel %vm59, %v1000, 0
  %v1107 = vsel %vm59, %v1001, 0
  %v1110 = vsel %vm59, %v1002, 0
  %v1113 = vsel %vm59, %v1003, 0
  %v1116 = vsel %vm59, %v1004, 0
  %v1119 = vsel %vm59, %v1005, 0
  %v1122 = vsel %vm59, %v1006, 0
  %v1125 = vsel %vm59, %v1007, 0
  %v1128 = vsel %vm59, %v1008, 0
  %v1131 = vsel %vm59, %v1009, 0
  %v1134 = vsel %vm59, %v1010, 0
  %v1137 = vsel %vm59, %v1011, 0
  %v1140 = vsel %vm59, %v1012, 0
  %1142 = vmatprep.subr.mxu0 0.0
  %1143 = vmatpush1.msra.mxu0 0.0
  %1144 = vmatprep.subr.mxu0 0.0
  %1145 = vmatpush1.msra.mxu0 0.0
  %1146 = vmatprep.subr.mxu0 0.0
  %1147 = vmatpush1.msra.mxu0 0.0
  %1148 = vmatprep.subr.mxu0 0.0
  %1149 = vmatpush1.msra.mxu0 0.0
  %1150 = vmatprep.subr.mxu0 0.0
  %1151 = vmatpush1.msra.mxu0 0.0
  %1152 = vmatprep.subr.mxu0 0.0
  %1153 = vmatpush1.msra.mxu0 0.0
  %1154 = vmatprep.subr.mxu0 0.0
  %1155 = vmatpush1.msra.mxu0 0.0
  %1156 = vmatprep.subr.mxu0 0.0
  %1157 = vmatpush1.msra.mxu0 0.0
  %1158 = vmatprep.subr.mxu0 0.0
  %1159 = vmatpush1.msra.mxu0 0.0
  %1160 = vmatprep.subr.mxu0 0.0
  %1161 = vmatpush1.msra.mxu0 0.0
  %1162 = vmatprep.subr.mxu0 0.0
  %1163 = vmatpush1.msra.mxu0 0.0
  %1164 = vmatprep.subr.mxu0 0.0
  %1165 = vmatpush1.msra.mxu0 0.0
  %1166 = vmatprep.subr.mxu0 0.0
  %1167 = vmatpush1.msra.mxu0 0.0
  %1168 = vmatprep.subr.mxu0 0.0
  %1169 = vmatpush1.msra.mxu0 0.0
  %1170 = vmatprep.subr.mxu0 0.0
  %1171 = vmatpush1.msra.mxu0 %v191
  %1172 = vmatprep.subr.mxu0 0.0
  %1173 = vmatpush1.msra.mxu0 %v14
  %1174 = vmatprep.subr.mxu0 0.0
  %1175 = vmatpush2.msra.mxu0 0.0
  %1176 = vmatprep.subr.mxu0 0.0
  %1177 = vmatpush2.msra.mxu0 0.0
  %1178 = vmatprep.subr.mxu0 0.0
  %1179 = vmatpush2.msra.mxu0 0.0
  %1180 = vmatprep.subr.mxu0 0.0
  %1181 = vmatpush2.msra.mxu0 0.0
  %1182 = vmatprep.subr.mxu0 0.0
  %1183 = vmatpush2.msra.mxu0 0.0
  %1184 = vmatprep.subr.mxu0 0.0
  %1185 = vmatpush2.msra.mxu0 0.0
  %1186 = vmatprep.subr.mxu0 0.0
  %1187 = vmatpush2.msra.mxu0 0.0
  %1188 = vmatprep.subr.mxu0 0.0
  %1189 = vmatpush2.msra.mxu0 0.0
  %1190 = vmatprep.subr.mxu0 0.0
  %1191 = vmatpush2.msra.mxu0 0.0
  %1192 = vmatprep.subr.mxu0 0.0
  %1193 = vmatpush2.msra.mxu0 0.0
  %1194 = vmatprep.subr.mxu0 0.0
  %1195 = vmatpush2.msra.mxu0 0.0
  %1196 = vmatprep.subr.mxu0 0.0
  %1197 = vmatpush2.msra.mxu0 0.0
  %1198 = vmatprep.subr.mxu0 0.0
  %1199 = vmatpush2.msra.mxu0 0.0
  %1200 = vmatprep.subr.mxu0 0.0
  %1201 = vmatpush2.msra.mxu0 0.0
  %1202 = vmatprep.subr.mxu0 0.0
  %1203 = vmatpush2.msra.mxu0 0.0
  %1204 = vmatprep.subr.mxu0 0.0
  %1205 = vmatpush2.msra.mxu0 0.0
  %1206 = vmatprep.mubr.f32.mxu0 0.0
  %1207 = vmatmul.mubr.f32.gmra.mxu0 %v1014
  %v1208 = vpop.f32.mrf.mxu0
  %v1209 = vadd.f32 0.0, %v1208
  %v1210 = vpop.f32.mrf.mxu0
  %1211 = vmatprep.mubr.f32.mxu0 0.0
  %1212 = vmatmul.mubr.f32.gmra.mxu0 %v1017
  %v1213 = vpop.f32.mrf.mxu0
  %v1214 = vadd.f32 0.0, %v1213
  %v1215 = vpop.f32.mrf.mxu0
  %1216 = vmatprep.mubr.f32.mxu0 0.0
  %1217 = vmatmul.mubr.f32.gmra.mxu0 %v1020
  %v1218 = vpop.f32.mrf.mxu0
  %v1219 = vadd.f32 0.0, %v1218
  %v1220 = vpop.f32.mrf.mxu0
  %1221 = vmatprep.mubr.f32.mxu0 0.0
  %1222 = vmatmul.mubr.f32.gmra.mxu0 %v1023
  %v1223 = vpop.f32.mrf.mxu0
  %v1224 = vadd.f32 0.0, %v1223
  %v1225 = vpop.f32.mrf.mxu0
  %1226 = vmatprep.mubr.f32.mxu0 0.0
  %1227 = vmatmul.mubr.f32.gmra.mxu0 %v1026
  %v1228 = vpop.f32.mrf.mxu0
  %v1229 = vadd.f32 0.0, %v1228
  %v1230 = vpop.f32.mrf.mxu0
  %1231 = vmatprep.mubr.f32.mxu0 0.0
  %1232 = vmatmul.mubr.f32.gmra.mxu0 %v1029
  %v1233 = vpop.f32.mrf.mxu0
  %v1234 = vadd.f32 0.0, %v1233
  %v1235 = vpop.f32.mrf.mxu0
  %1236 = vmatprep.mubr.f32.mxu0 0.0
  %1237 = vmatmul.mubr.f32.gmra.mxu0 %v1032
  %v1238 = vpop.f32.mrf.mxu0
  %v1239 = vadd.f32 0.0, %v1238
  %v1240 = vpop.f32.mrf.mxu0
  %1241 = vmatprep.mubr.f32.mxu0 0.0
  %1242 = vmatmul.mubr.f32.gmra.mxu0 %v1035
  %v1243 = vpop.f32.mrf.mxu0
  %v1244 = vadd.f32 0.0, %v1243
  %v1245 = vpop.f32.mrf.mxu0
  %1246 = vmatprep.mubr.f32.mxu0 0.0
  %1247 = vmatmul.mubr.f32.gmra.mxu0 %v1038
  %v1248 = vpop.f32.mrf.mxu0
  %v1249 = vadd.f32 0.0, %v1248
  %v1250 = vpop.f32.mrf.mxu0
  %1251 = vmatprep.mubr.f32.mxu0 0.0
  %1252 = vmatmul.mubr.f32.gmra.mxu0 %v1041
  %v1253 = vpop.f32.mrf.mxu0
  %v1254 = vadd.f32 0.0, %v1253
  %v1255 = vpop.f32.mrf.mxu0
  %1256 = vmatprep.mubr.f32.mxu0 0.0
  %1257 = vmatmul.mubr.f32.gmra.mxu0 %v1044
  %v1258 = vpop.f32.mrf.mxu0
  %v1259 = vadd.f32 0.0, %v1258
  %v1260 = vpop.f32.mrf.mxu0
  %1261 = vmatprep.mubr.f32.mxu0 0.0
  %1262 = vmatmul.mubr.f32.gmra.mxu0 %v1047
  %v1263 = vpop.f32.mrf.mxu0
  %v1264 = vadd.f32 0.0, %v1263
  %v1265 = vpop.f32.mrf.mxu0
  %1266 = vmatprep.mubr.f32.mxu0 0.0
  %1267 = vmatmul.mubr.f32.gmra.mxu0 %v1050
  %v1268 = vpop.f32.mrf.mxu0
  %v1269 = vadd.f32 0.0, %v1268
  %v1270 = vpop.f32.mrf.mxu0
  %1271 = vmatprep.mubr.f32.mxu0 0.0
  %1272 = vmatmul.mubr.f32.gmra.mxu0 %v1053
  %v1273 = vpop.f32.mrf.mxu0
  %v1274 = vadd.f32 0.0, %v1273
  %v1275 = vpop.f32.mrf.mxu0
  %1276 = vmatprep.mubr.f32.mxu0 0.0
  %1277 = vmatmul.mubr.f32.gmra.mxu0 %v1056
  %v1278 = vpop.f32.mrf.mxu0
  %v1279 = vadd.f32 0.0, %v1278
  %v1280 = vpop.f32.mrf.mxu0
  %1281 = vmatprep.mubr.f32.mxu0 0.0
  %1282 = vmatmul.mubr.f32.gmra.mxu0 %v1059
  %v1283 = vpop.f32.mrf.mxu0
  %v1284 = vadd.f32 0.0, %v1283
  %v1285 = vpop.f32.mrf.mxu0
  %1286 = vmatprep.mubr.f32.mxu0 0.0
  %1287 = vmatmul.mubr.f32.gmra.mxu0 %v1062
  %v1288 = vpop.f32.mrf.mxu0
  %v1289 = vadd.f32 0.0, %v1288
  %v1290 = vpop.f32.mrf.mxu0
  %1291 = vmatprep.mubr.f32.mxu0 0.0
  %1292 = vmatmul.mubr.f32.gmra.mxu0 %v1065
  %v1293 = vpop.f32.mrf.mxu0
  %v1294 = vadd.f32 0.0, %v1293
  %v1295 = vpop.f32.mrf.mxu0
  %1296 = vmatprep.mubr.f32.mxu0 0.0
  %1297 = vmatmul.mubr.f32.gmra.mxu0 %v1068
  %v1298 = vpop.f32.mrf.mxu0
  %v1299 = vadd.f32 0.0, %v1298
  %v1300 = vpop.f32.mrf.mxu0
  %1301 = vmatprep.mubr.f32.mxu0 0.0
  %1302 = vmatmul.mubr.f32.gmra.mxu0 %v1071
  %v1303 = vpop.f32.mrf.mxu0
  %v1304 = vadd.f32 0.0, %v1303
  %v1305 = vpop.f32.mrf.mxu0
  %1306 = vmatprep.mubr.f32.mxu0 0.0
  %1307 = vmatmul.mubr.f32.gmra.mxu0 %v1074
  %v1308 = vpop.f32.mrf.mxu0
  %v1309 = vadd.f32 0.0, %v1308
  %v1310 = vpop.f32.mrf.mxu0
  %1311 = vmatprep.mubr.f32.mxu0 0.0
  %1312 = vmatmul.mubr.f32.gmra.mxu0 %v1077
  %v1313 = vpop.f32.mrf.mxu0
  %v1314 = vadd.f32 0.0, %v1313
  %v1315 = vpop.f32.mrf.mxu0
  %1316 = vmatprep.mubr.f32.mxu0 0.0
  %1317 = vmatmul.mubr.f32.gmra.mxu0 %v1080
  %v1318 = vpop.f32.mrf.mxu0
  %v1319 = vadd.f32 0.0, %v1318
  %v1320 = vpop.f32.mrf.mxu0
  %1321 = vmatprep.mubr.f32.mxu0 0.0
  %1322 = vmatmul.mubr.f32.gmra.mxu0 %v1083
  %v1323 = vpop.f32.mrf.mxu0
  %v1324 = vadd.f32 0.0, %v1323
  %v1325 = vpop.f32.mrf.mxu0
  %1326 = vmatprep.mubr.f32.mxu0 0.0
  %1327 = vmatmul.mubr.f32.gmra.mxu0 %v1086
  %v1328 = vpop.f32.mrf.mxu0
  %v1329 = vadd.f32 0.0, %v1328
  %v1330 = vpop.f32.mrf.mxu0
  %1331 = vmatprep.mubr.f32.mxu0 0.0
  %1332 = vmatmul.mubr.f32.gmra.mxu0 %v1089
  %v1333 = vpop.f32.mrf.mxu0
  %v1334 = vadd.f32 0.0, %v1333
  %v1335 = vpop.f32.mrf.mxu0
  %1336 = vmatprep.mubr.f32.mxu0 0.0
  %1337 = vmatmul.mubr.f32.gmra.mxu0 %v1092
  %v1338 = vpop.f32.mrf.mxu0
  %v1339 = vadd.f32 0.0, %v1338
  %v1340 = vpop.f32.mrf.mxu0
  %1341 = vmatprep.mubr.f32.mxu0 0.0
  %1342 = vmatmul.mubr.f32.gmra.mxu0 %v1095
  %v1343 = vpop.f32.mrf.mxu0
  %v1344 = vadd.f32 0.0, %v1343
  %v1345 = vpop.f32.mrf.mxu0
  %1346 = vmatprep.mubr.f32.mxu0 0.0
  %1347 = vmatmul.mubr.f32.gmra.mxu0 %v1098
  %v1348 = vpop.f32.mrf.mxu0
  %v1349 = vadd.f32 0.0, %v1348
  %v1350 = vpop.f32.mrf.mxu0
  %1351 = vmatprep.mubr.f32.mxu0 0.0
  %1352 = vmatmul.mubr.f32.gmra.mxu0 %v1101
  %v1353 = vpop.f32.mrf.mxu0
  %v1354 = vadd.f32 0.0, %v1353
  %v1355 = vpop.f32.mrf.mxu0
  %1356 = vmatprep.mubr.f32.mxu0 0.0
  %1357 = vmatmul.mubr.f32.gmra.mxu0 %v1104
  %v1358 = vpop.f32.mrf.mxu0
  %v1359 = vadd.f32 0.0, %v1358
  %v1360 = vpop.f32.mrf.mxu0
  %1361 = vmatprep.mubr.f32.mxu0 0.0
  %1362 = vmatmul.mubr.f32.gmra.mxu0 %v1107
  %v1363 = vpop.f32.mrf.mxu0
  %v1364 = vadd.f32 0.0, %v1363
  %v1365 = vpop.f32.mrf.mxu0
  %1366 = vmatprep.mubr.f32.mxu0 0.0
  %1367 = vmatmul.mubr.f32.gmra.mxu0 %v1110
  %v1368 = vpop.f32.mrf.mxu0
  %v1369 = vadd.f32 0.0, %v1368
  %v1370 = vpop.f32.mrf.mxu0
  %1371 = vmatprep.mubr.f32.mxu0 0.0
  %1372 = vmatmul.mubr.f32.gmra.mxu0 %v1113
  %v1373 = vpop.f32.mrf.mxu0
  %v1374 = vadd.f32 0.0, %v1373
  %v1375 = vpop.f32.mrf.mxu0
  %1376 = vmatprep.mubr.f32.mxu0 0.0
  %1377 = vmatmul.mubr.f32.gmra.mxu0 %v1116
  %v1378 = vpop.f32.mrf.mxu0
  %v1379 = vadd.f32 0.0, %v1378
  %v1380 = vpop.f32.mrf.mxu0
  %1381 = vmatprep.mubr.f32.mxu0 0.0
  %1382 = vmatmul.mubr.f32.gmra.mxu0 %v1119
  %v1383 = vpop.f32.mrf.mxu0
  %v1384 = vadd.f32 0.0, %v1383
  %v1385 = vpop.f32.mrf.mxu0
  %1386 = vmatprep.mubr.f32.mxu0 0.0
  %1387 = vmatmul.mubr.f32.gmra.mxu0 %v1122
  %v1388 = vpop.f32.mrf.mxu0
  %v1389 = vadd.f32 0.0, %v1388
  %v1390 = vpop.f32.mrf.mxu0
  %1391 = vmatprep.mubr.f32.mxu0 0.0
  %1392 = vmatmul.mubr.f32.gmra.mxu0 %v1125
  %v1393 = vpop.f32.mrf.mxu0
  %v1394 = vadd.f32 0.0, %v1393
  %v1395 = vpop.f32.mrf.mxu0
  %1396 = vmatprep.mubr.f32.mxu0 0.0
  %1397 = vmatmul.mubr.f32.gmra.mxu0 %v1128
  %v1398 = vpop.f32.mrf.mxu0
  %v1399 = vadd.f32 0.0, %v1398
  %v1400 = vpop.f32.mrf.mxu0
  %1401 = vmatprep.mubr.f32.mxu0 0.0
  %1402 = vmatmul.mubr.f32.gmra.mxu0 %v1131
  %v1403 = vpop.f32.mrf.mxu0
  %v1404 = vadd.f32 0.0, %v1403
  %v1405 = vpop.f32.mrf.mxu0
  %1406 = vmatprep.mubr.f32.mxu0 0.0
  %1407 = vmatmul.mubr.f32.gmra.mxu0 %v1134
  %v1408 = vpop.f32.mrf.mxu0
  %v1409 = vadd.f32 0.0, %v1408
  %v1410 = vpop.f32.mrf.mxu0
  %1411 = vmatprep.mubr.f32.mxu0 0.0
  %1412 = vmatmul.mubr.f32.gmra.mxu0 %v1137
  %v1413 = vpop.f32.mrf.mxu0
  %v1414 = vadd.f32 0.0, %v1413
  %v1415 = vpop.f32.mrf.mxu0
  %1416 = vmatprep.mubr.f32.mxu0 0.0
  %1417 = vmatmul.mubr.f32.gmra.mxu0 %v1140
  %v1418 = vpop.f32.mrf.mxu0
  %v1419 = vadd.f32 0.0, %v1418
  %v1420 = vpop.f32.mrf.mxu0
  %1421 = vdwg.mxu0
  %v1422 = vmax.f32 %v926, %v1209
  %v1423 = vmax.f32 %v927, %v1214
  %v1424 = vmax.f32 %v928, %v1219
  %v1425 = vmax.f32 %v929, %v1224
  %v1426 = vmax.f32 %v930, %v1229
  %v1427 = vmax.f32 %v931, %v1234
  %v1428 = vmax.f32 %v932, %v1239
  %v1429 = vmax.f32 %v933, %v1244
  %v1430 = vmax.f32 %v934, %v1249
  %v1431 = vmax.f32 %v935, %v1254
  %v1432 = vmax.f32 %v936, %v1259
  %v1433 = vmax.f32 %v937, %v1264
  %v1434 = vmax.f32 %v938, %v1269
  %v1435 = vmax.f32 %v939, %v1274
  %v1436 = vmax.f32 %v940, %v1279
  %v1437 = vmax.f32 %v941, %v1284
  %v1438 = vmax.f32 %v942, %v1289
  %v1439 = vmax.f32 %v943, %v1294
  %v1440 = vmax.f32 %v944, %v1299
  %v1441 = vmax.f32 %v945, %v1304
  %v1442 = vmax.f32 %v946, %v1309
  %v1443 = vmax.f32 %v947, %v1314
  %v1444 = vmax.f32 %v948, %v1319
  %v1445 = vmax.f32 %v949, %v1324
  %v1446 = vmax.f32 %v950, %v1329
  %v1447 = vmax.f32 %v951, %v1334
  %v1448 = vmax.f32 %v952, %v1339
  %v1449 = vmax.f32 %v953, %v1344
  %v1450 = vmax.f32 %v954, %v1349
  %v1451 = vmax.f32 %v955, %v1354
  %v1452 = vmax.f32 %v956, %v1359
  %v1453 = vmax.f32 %v957, %v1364
  %v1454 = vmax.f32 %v958, %v1369
  %v1455 = vmax.f32 %v959, %v1374
  %v1456 = vmax.f32 %v960, %v1379
  %v1457 = vmax.f32 %v961, %v1384
  %v1458 = vmax.f32 %v962, %v1389
  %v1459 = vmax.f32 %v963, %v1394
  %v1460 = vmax.f32 %v964, %v1399
  %v1461 = vmax.f32 %v965, %v1404
  %v1462 = vmax.f32 %v966, %v1409
  %v1463 = vmax.f32 %v967, %v1414
  %v1464 = vmax.f32 %v968, %v1419
  %s1465 = scalar_lea.vmem %s0, 1032
  %v1466 = vld [vmem:[%s1465] sm:$0xff]
  %v1467 = vld [vmem:[%s1465 + $0x8] sm:$0xff]
  %v1468 = vld [vmem:[%s1465 + $0x10] sm:$0xff]
  %v1469 = vld [vmem:[%s1465 + $0x18] sm:$0xff]
  %v1470 = vld [vmem:[%s1465 + $0x20] sm:$0xff]
  %v1471 = vld [vmem:[%s1465 + $0x28] sm:$0xff]
  %v1472 = vld [vmem:[%s1465 + $0x30] sm:$0xff]
  %v1473 = vld [vmem:[%s1465 + $0x38] sm:$0xff]
  %v1474 = vld [vmem:[%s1465 + $0x40] sm:$0xff]
  %v1475 = vld [vmem:[%s1465 + $0x48] sm:$0xff]
  %v1476 = vld [vmem:[%s1465 + $0x50] sm:$0xff]
  %v1477 = vld [vmem:[%s1465 + $0x58] sm:$0xff]
  %v1478 = vld [vmem:[%s1465 + $0x60] sm:$0xff]
  %v1479 = vld [vmem:[%s1465 + $0x68] sm:$0xff]
  %v1480 = vld [vmem:[%s1465 + $0x70] sm:$0xff]
  %v1481 = vld [vmem:[%s1465 + $0x78] sm:$0xff]
  %v1482 = vld [vmem:[%s1465 + $0x80] sm:$0xff]
  %v1483 = vld [vmem:[%s1465 + $0x88] sm:$0xff]
  %v1484 = vld [vmem:[%s1465 + $0x90] sm:$0xff]
  %v1485 = vld [vmem:[%s1465 + $0x98] sm:$0xff]
  %v1486 = vld [vmem:[%s1465 + $0xa0] sm:$0xff]
  %v1487 = vld [vmem:[%s1465 + $0xa8] sm:$0xff]
  %v1488 = vld [vmem:[%s1465 + $0xb0] sm:$0xff]
  %v1489 = vld [vmem:[%s1465 + $0xb8] sm:$0xff]
  %v1490 = vld [vmem:[%s1465 + $0xc0] sm:$0xff]
  %v1491 = vld [vmem:[%s1465 + $0xc8] sm:$0xff]
  %v1492 = vld [vmem:[%s1465 + $0xd0] sm:$0xff]
  %v1493 = vld [vmem:[%s1465 + $0xd8] sm:$0xff]
  %v1494 = vld [vmem:[%s1465 + $0xe0] sm:$0xff]
  %v1495 = vld [vmem:[%s1465 + $0xe8] sm:$0xff]
  %v1496 = vld [vmem:[%s1465 + $0xf0] sm:$0xff]
  %v1497 = vld [vmem:[%s1465 + $0xf8] sm:$0xff]
  %v1498 = vld [vmem:[%s1465 + $0x100] sm:$0xff]
  %v1499 = vld [vmem:[%s1465 + $0x108] sm:$0xff]
  %v1500 = vld [vmem:[%s1465 + $0x110] sm:$0xff]
  %v1501 = vld [vmem:[%s1465 + $0x118] sm:$0xff]
  %v1502 = vld [vmem:[%s1465 + $0x120] sm:$0xff]
  %v1503 = vld [vmem:[%s1465 + $0x128] sm:$0xff]
  %v1504 = vld [vmem:[%s1465 + $0x130] sm:$0xff]
  %v1505 = vld [vmem:[%s1465 + $0x138] sm:$0xff]
  %v1506 = vld [vmem:[%s1465 + $0x140] sm:$0xff]
  %v1507 = vld [vmem:[%s1465 + $0x148] sm:$0xff]
  %v1508 = vld [vmem:[%s1465 + $0x150] sm:$0x3]
  %v1510 = vsel %vm59, %v1466, 0
  %v1513 = vsel %vm59, %v1467, 0
  %v1516 = vsel %vm59, %v1468, 0
  %v1519 = vsel %vm59, %v1469, 0
  %v1522 = vsel %vm59, %v1470, 0
  %v1525 = vsel %vm59, %v1471, 0
  %v1528 = vsel %vm59, %v1472, 0
  %v1531 = vsel %vm59, %v1473, 0
  %v1534 = vsel %vm59, %v1474, 0
  %v1537 = vsel %vm59, %v1475, 0
  %v1540 = vsel %vm59, %v1476, 0
  %v1543 = vsel %vm59, %v1477, 0
  %v1546 = vsel %vm59, %v1478, 0
  %v1549 = vsel %vm59, %v1479, 0
  %v1552 = vsel %vm59, %v1480, 0
  %v1555 = vsel %vm59, %v1481, 0
  %v1558 = vsel %vm59, %v1482, 0
  %v1561 = vsel %vm59, %v1483, 0
  %v1564 = vsel %vm59, %v1484, 0
  %v1567 = vsel %vm59, %v1485, 0
  %v1570 = vsel %vm59, %v1486, 0
  %v1573 = vsel %vm59, %v1487, 0
  %v1576 = vsel %vm59, %v1488, 0
  %v1579 = vsel %vm59, %v1489, 0
  %v1582 = vsel %vm59, %v1490, 0
  %v1585 = vsel %vm59, %v1491, 0
  %v1588 = vsel %vm59, %v1492, 0
  %v1591 = vsel %vm59, %v1493, 0
  %v1594 = vsel %vm59, %v1494, 0
  %v1597 = vsel %vm59, %v1495, 0
  %v1600 = vsel %vm59, %v1496, 0
  %v1603 = vsel %vm59, %v1497, 0
  %v1606 = vsel %vm59, %v1498, 0
  %v1609 = vsel %vm59, %v1499, 0
  %v1612 = vsel %vm59, %v1500, 0
  %v1615 = vsel %vm59, %v1501, 0
  %v1618 = vsel %vm59, %v1502, 0
  %v1621 = vsel %vm59, %v1503, 0
  %v1624 = vsel %vm59, %v1504, 0
  %v1627 = vsel %vm59, %v1505, 0
  %v1630 = vsel %vm59, %v1506, 0
  %v1633 = vsel %vm59, %v1507, 0
  %v1636 = vsel %vm59, %v1508, 0
  %1638 = vmatprep.subr.mxu0 0.0
  %1639 = vmatpush1.msra.mxu0 0.0
  %1640 = vmatprep.subr.mxu0 0.0
  %1641 = vmatpush1.msra.mxu0 0.0
  %1642 = vmatprep.subr.mxu0 0.0
  %1643 = vmatpush1.msra.mxu0 0.0
  %1644 = vmatprep.subr.mxu0 0.0
  %1645 = vmatpush1.msra.mxu0 0.0
  %1646 = vmatprep.subr.mxu0 0.0
  %1647 = vmatpush1.msra.mxu0 0.0
  %1648 = vmatprep.subr.mxu0 0.0
  %1649 = vmatpush1.msra.mxu0 0.0
  %1650 = vmatprep.subr.mxu0 0.0
  %1651 = vmatpush1.msra.mxu0 0.0
  %1652 = vmatprep.subr.mxu0 0.0
  %1653 = vmatpush1.msra.mxu0 0.0
  %1654 = vmatprep.subr.mxu0 0.0
  %1655 = vmatpush1.msra.mxu0 0.0
  %1656 = vmatprep.subr.mxu0 0.0
  %1657 = vmatpush1.msra.mxu0 0.0
  %1658 = vmatprep.subr.mxu0 0.0
  %1659 = vmatpush1.msra.mxu0 0.0
  %1660 = vmatprep.subr.mxu0 0.0
  %1661 = vmatpush1.msra.mxu0 0.0
  %1662 = vmatprep.subr.mxu0 0.0
  %1663 = vmatpush1.msra.mxu0 0.0
  %1664 = vmatprep.subr.mxu0 0.0
  %1665 = vmatpush1.msra.mxu0 0.0
  %1666 = vmatprep.subr.mxu0 0.0
  %1667 = vmatpush1.msra.mxu0 %v191
  %1668 = vmatprep.subr.mxu0 0.0
  %1669 = vmatpush1.msra.mxu0 %v14
  %1670 = vmatprep.subr.mxu0 0.0
  %1671 = vmatpush2.msra.mxu0 0.0
  %1672 = vmatprep.subr.mxu0 0.0
  %1673 = vmatpush2.msra.mxu0 0.0
  %1674 = vmatprep.subr.mxu0 0.0
  %1675 = vmatpush2.msra.mxu0 0.0
  %1676 = vmatprep.subr.mxu0 0.0
  %1677 = vmatpush2.msra.mxu0 0.0
  %1678 = vmatprep.subr.mxu0 0.0
  %1679 = vmatpush2.msra.mxu0 0.0
  %1680 = vmatprep.subr.mxu0 0.0
  %1681 = vmatpush2.msra.mxu0 0.0
  %1682 = vmatprep.subr.mxu0 0.0
  %1683 = vmatpush2.msra.mxu0 0.0
  %1684 = vmatprep.subr.mxu0 0.0
  %1685 = vmatpush2.msra.mxu0 0.0
  %1686 = vmatprep.subr.mxu0 0.0
  %1687 = vmatpush2.msra.mxu0 0.0
  %1688 = vmatprep.subr.mxu0 0.0
  %1689 = vmatpush2.msra.mxu0 0.0
  %1690 = vmatprep.subr.mxu0 0.0
  %1691 = vmatpush2.msra.mxu0 0.0
  %1692 = vmatprep.subr.mxu0 0.0
  %1693 = vmatpush2.msra.mxu0 0.0
  %1694 = vmatprep.subr.mxu0 0.0
  %1695 = vmatpush2.msra.mxu0 0.0
  %1696 = vmatprep.subr.mxu0 0.0
  %1697 = vmatpush2.msra.mxu0 0.0
  %1698 = vmatprep.subr.mxu0 0.0
  %1699 = vmatpush2.msra.mxu0 0.0
  %1700 = vmatprep.subr.mxu0 0.0
  %1701 = vmatpush2.msra.mxu0 0.0
  %1702 = vmatprep.mubr.f32.mxu0 0.0
  %1703 = vmatmul.mubr.f32.gmra.mxu0 %v1510
  %v1704 = vpop.f32.mrf.mxu0
  %v1705 = vadd.f32 0.0, %v1704
  %v1706 = vpop.f32.mrf.mxu0
  %1707 = vmatprep.mubr.f32.mxu0 0.0
  %1708 = vmatmul.mubr.f32.gmra.mxu0 %v1513
  %v1709 = vpop.f32.mrf.mxu0
  %v1710 = vadd.f32 0.0, %v1709
  %v1711 = vpop.f32.mrf.mxu0
  %1712 = vmatprep.mubr.f32.mxu0 0.0
  %1713 = vmatmul.mubr.f32.gmra.mxu0 %v1516
  %v1714 = vpop.f32.mrf.mxu0
  %v1715 = vadd.f32 0.0, %v1714
  %v1716 = vpop.f32.mrf.mxu0
  %1717 = vmatprep.mubr.f32.mxu0 0.0
  %1718 = vmatmul.mubr.f32.gmra.mxu0 %v1519
  %v1719 = vpop.f32.mrf.mxu0
  %v1720 = vadd.f32 0.0, %v1719
  %v1721 = vpop.f32.mrf.mxu0
  %1722 = vmatprep.mubr.f32.mxu0 0.0
  %1723 = vmatmul.mubr.f32.gmra.mxu0 %v1522
  %v1724 = vpop.f32.mrf.mxu0
  %v1725 = vadd.f32 0.0, %v1724
  %v1726 = vpop.f32.mrf.mxu0
  %1727 = vmatprep.mubr.f32.mxu0 0.0
  %1728 = vmatmul.mubr.f32.gmra.mxu0 %v1525
  %v1729 = vpop.f32.mrf.mxu0
  %v1730 = vadd.f32 0.0, %v1729
  %v1731 = vpop.f32.mrf.mxu0
  %1732 = vmatprep.mubr.f32.mxu0 0.0
  %1733 = vmatmul.mubr.f32.gmra.mxu0 %v1528
  %v1734 = vpop.f32.mrf.mxu0
  %v1735 = vadd.f32 0.0, %v1734
  %v1736 = vpop.f32.mrf.mxu0
  %1737 = vmatprep.mubr.f32.mxu0 0.0
  %1738 = vmatmul.mubr.f32.gmra.mxu0 %v1531
  %v1739 = vpop.f32.mrf.mxu0
  %v1740 = vadd.f32 0.0, %v1739
  %v1741 = vpop.f32.mrf.mxu0
  %1742 = vmatprep.mubr.f32.mxu0 0.0
  %1743 = vmatmul.mubr.f32.gmra.mxu0 %v1534
  %v1744 = vpop.f32.mrf.mxu0
  %v1745 = vadd.f32 0.0, %v1744
  %v1746 = vpop.f32.mrf.mxu0
  %1747 = vmatprep.mubr.f32.mxu0 0.0
  %1748 = vmatmul.mubr.f32.gmra.mxu0 %v1537
  %v1749 = vpop.f32.mrf.mxu0
  %v1750 = vadd.f32 0.0, %v1749
  %v1751 = vpop.f32.mrf.mxu0
  %1752 = vmatprep.mubr.f32.mxu0 0.0
  %1753 = vmatmul.mubr.f32.gmra.mxu0 %v1540
  %v1754 = vpop.f32.mrf.mxu0
  %v1755 = vadd.f32 0.0, %v1754
  %v1756 = vpop.f32.mrf.mxu0
  %1757 = vmatprep.mubr.f32.mxu0 0.0
  %1758 = vmatmul.mubr.f32.gmra.mxu0 %v1543
  %v1759 = vpop.f32.mrf.mxu0
  %v1760 = vadd.f32 0.0, %v1759
  %v1761 = vpop.f32.mrf.mxu0
  %1762 = vmatprep.mubr.f32.mxu0 0.0
  %1763 = vmatmul.mubr.f32.gmra.mxu0 %v1546
  %v1764 = vpop.f32.mrf.mxu0
  %v1765 = vadd.f32 0.0, %v1764
  %v1766 = vpop.f32.mrf.mxu0
  %1767 = vmatprep.mubr.f32.mxu0 0.0
  %1768 = vmatmul.mubr.f32.gmra.mxu0 %v1549
  %v1769 = vpop.f32.mrf.mxu0
  %v1770 = vadd.f32 0.0, %v1769
  %v1771 = vpop.f32.mrf.mxu0
  %1772 = vmatprep.mubr.f32.mxu0 0.0
  %1773 = vmatmul.mubr.f32.gmra.mxu0 %v1552
  %v1774 = vpop.f32.mrf.mxu0
  %v1775 = vadd.f32 0.0, %v1774
  %v1776 = vpop.f32.mrf.mxu0
  %1777 = vmatprep.mubr.f32.mxu0 0.0
  %1778 = vmatmul.mubr.f32.gmra.mxu0 %v1555
  %v1779 = vpop.f32.mrf.mxu0
  %v1780 = vadd.f32 0.0, %v1779
  %v1781 = vpop.f32.mrf.mxu0
  %1782 = vmatprep.mubr.f32.mxu0 0.0
  %1783 = vmatmul.mubr.f32.gmra.mxu0 %v1558
  %v1784 = vpop.f32.mrf.mxu0
  %v1785 = vadd.f32 0.0, %v1784
  %v1786 = vpop.f32.mrf.mxu0
  %1787 = vmatprep.mubr.f32.mxu0 0.0
  %1788 = vmatmul.mubr.f32.gmra.mxu0 %v1561
  %v1789 = vpop.f32.mrf.mxu0
  %v1790 = vadd.f32 0.0, %v1789
  %v1791 = vpop.f32.mrf.mxu0
  %1792 = vmatprep.mubr.f32.mxu0 0.0
  %1793 = vmatmul.mubr.f32.gmra.mxu0 %v1564
  %v1794 = vpop.f32.mrf.mxu0
  %v1795 = vadd.f32 0.0, %v1794
  %v1796 = vpop.f32.mrf.mxu0
  %1797 = vmatprep.mubr.f32.mxu0 0.0
  %1798 = vmatmul.mubr.f32.gmra.mxu0 %v1567
  %v1799 = vpop.f32.mrf.mxu0
  %v1800 = vadd.f32 0.0, %v1799
  %v1801 = vpop.f32.mrf.mxu0
  %1802 = vmatprep.mubr.f32.mxu0 0.0
  %1803 = vmatmul.mubr.f32.gmra.mxu0 %v1570
  %v1804 = vpop.f32.mrf.mxu0
  %v1805 = vadd.f32 0.0, %v1804
  %v1806 = vpop.f32.mrf.mxu0
  %1807 = vmatprep.mubr.f32.mxu0 0.0
  %1808 = vmatmul.mubr.f32.gmra.mxu0 %v1573
  %v1809 = vpop.f32.mrf.mxu0
  %v1810 = vadd.f32 0.0, %v1809
  %v1811 = vpop.f32.mrf.mxu0
  %1812 = vmatprep.mubr.f32.mxu0 0.0
  %1813 = vmatmul.mubr.f32.gmra.mxu0 %v1576
  %v1814 = vpop.f32.mrf.mxu0
  %v1815 = vadd.f32 0.0, %v1814
  %v1816 = vpop.f32.mrf.mxu0
  %1817 = vmatprep.mubr.f32.mxu0 0.0
  %1818 = vmatmul.mubr.f32.gmra.mxu0 %v1579
  %v1819 = vpop.f32.mrf.mxu0
  %v1820 = vadd.f32 0.0, %v1819
  %v1821 = vpop.f32.mrf.mxu0
  %1822 = vmatprep.mubr.f32.mxu0 0.0
  %1823 = vmatmul.mubr.f32.gmra.mxu0 %v1582
  %v1824 = vpop.f32.mrf.mxu0
  %v1825 = vadd.f32 0.0, %v1824
  %v1826 = vpop.f32.mrf.mxu0
  %1827 = vmatprep.mubr.f32.mxu0 0.0
  %1828 = vmatmul.mubr.f32.gmra.mxu0 %v1585
  %v1829 = vpop.f32.mrf.mxu0
  %v1830 = vadd.f32 0.0, %v1829
  %v1831 = vpop.f32.mrf.mxu0
  %1832 = vmatprep.mubr.f32.mxu0 0.0
  %1833 = vmatmul.mubr.f32.gmra.mxu0 %v1588
  %v1834 = vpop.f32.mrf.mxu0
  %v1835 = vadd.f32 0.0, %v1834
  %v1836 = vpop.f32.mrf.mxu0
  %1837 = vmatprep.mubr.f32.mxu0 0.0
  %1838 = vmatmul.mubr.f32.gmra.mxu0 %v1591
  %v1839 = vpop.f32.mrf.mxu0
  %v1840 = vadd.f32 0.0, %v1839
  %v1841 = vpop.f32.mrf.mxu0
  %1842 = vmatprep.mubr.f32.mxu0 0.0
  %1843 = vmatmul.mubr.f32.gmra.mxu0 %v1594
  %v1844 = vpop.f32.mrf.mxu0
  %v1845 = vadd.f32 0.0, %v1844
  %v1846 = vpop.f32.mrf.mxu0
  %1847 = vmatprep.mubr.f32.mxu0 0.0
  %1848 = vmatmul.mubr.f32.gmra.mxu0 %v1597
  %v1849 = vpop.f32.mrf.mxu0
  %v1850 = vadd.f32 0.0, %v1849
  %v1851 = vpop.f32.mrf.mxu0
  %1852 = vmatprep.mubr.f32.mxu0 0.0
  %1853 = vmatmul.mubr.f32.gmra.mxu0 %v1600
  %v1854 = vpop.f32.mrf.mxu0
  %v1855 = vadd.f32 0.0, %v1854
  %v1856 = vpop.f32.mrf.mxu0
  %1857 = vmatprep.mubr.f32.mxu0 0.0
  %1858 = vmatmul.mubr.f32.gmra.mxu0 %v1603
  %v1859 = vpop.f32.mrf.mxu0
  %v1860 = vadd.f32 0.0, %v1859
  %v1861 = vpop.f32.mrf.mxu0
  %1862 = vmatprep.mubr.f32.mxu0 0.0
  %1863 = vmatmul.mubr.f32.gmra.mxu0 %v1606
  %v1864 = vpop.f32.mrf.mxu0
  %v1865 = vadd.f32 0.0, %v1864
  %v1866 = vpop.f32.mrf.mxu0
  %1867 = vmatprep.mubr.f32.mxu0 0.0
  %1868 = vmatmul.mubr.f32.gmra.mxu0 %v1609
  %v1869 = vpop.f32.mrf.mxu0
  %v1870 = vadd.f32 0.0, %v1869
  %v1871 = vpop.f32.mrf.mxu0
  %1872 = vmatprep.mubr.f32.mxu0 0.0
  %1873 = vmatmul.mubr.f32.gmra.mxu0 %v1612
  %v1874 = vpop.f32.mrf.mxu0
  %v1875 = vadd.f32 0.0, %v1874
  %v1876 = vpop.f32.mrf.mxu0
  %1877 = vmatprep.mubr.f32.mxu0 0.0
  %1878 = vmatmul.mubr.f32.gmra.mxu0 %v1615
  %v1879 = vpop.f32.mrf.mxu0
  %v1880 = vadd.f32 0.0, %v1879
  %v1881 = vpop.f32.mrf.mxu0
  %1882 = vmatprep.mubr.f32.mxu0 0.0
  %1883 = vmatmul.mubr.f32.gmra.mxu0 %v1618
  %v1884 = vpop.f32.mrf.mxu0
  %v1885 = vadd.f32 0.0, %v1884
  %v1886 = vpop.f32.mrf.mxu0
  %1887 = vmatprep.mubr.f32.mxu0 0.0
  %1888 = vmatmul.mubr.f32.gmra.mxu0 %v1621
  %v1889 = vpop.f32.mrf.mxu0
  %v1890 = vadd.f32 0.0, %v1889
  %v1891 = vpop.f32.mrf.mxu0
  %1892 = vmatprep.mubr.f32.mxu0 0.0
  %1893 = vmatmul.mubr.f32.gmra.mxu0 %v1624
  %v1894 = vpop.f32.mrf.mxu0
  %v1895 = vadd.f32 0.0, %v1894
  %v1896 = vpop.f32.mrf.mxu0
  %1897 = vmatprep.mubr.f32.mxu0 0.0
  %1898 = vmatmul.mubr.f32.gmra.mxu0 %v1627
  %v1899 = vpop.f32.mrf.mxu0
  %v1900 = vadd.f32 0.0, %v1899
  %v1901 = vpop.f32.mrf.mxu0
  %1902 = vmatprep.mubr.f32.mxu0 0.0
  %1903 = vmatmul.mubr.f32.gmra.mxu0 %v1630
  %v1904 = vpop.f32.mrf.mxu0
  %v1905 = vadd.f32 0.0, %v1904
  %v1906 = vpop.f32.mrf.mxu0
  %1907 = vmatprep.mubr.f32.mxu0 0.0
  %1908 = vmatmul.mubr.f32.gmra.mxu0 %v1633
  %v1909 = vpop.f32.mrf.mxu0
  %v1910 = vadd.f32 0.0, %v1909
  %v1911 = vpop.f32.mrf.mxu0
  %1912 = vmatprep.mubr.f32.mxu0 0.0
  %1913 = vmatmul.mubr.f32.gmra.mxu0 %v1636
  %v1914 = vpop.f32.mrf.mxu0
  %v1915 = vadd.f32 0.0, %v1914
  %v1916 = vpop.f32.mrf.mxu0
  %1917 = vdwg.mxu0
  %v1918 = vmax.f32 %v1422, %v1705
  %v1919 = vmax.f32 %v1423, %v1710
  %v1920 = vmax.f32 %v1424, %v1715
  %v1921 = vmax.f32 %v1425, %v1720
  %v1922 = vmax.f32 %v1426, %v1725
  %v1923 = vmax.f32 %v1427, %v1730
  %v1924 = vmax.f32 %v1428, %v1735
  %v1925 = vmax.f32 %v1429, %v1740
  %v1926 = vmax.f32 %v1430, %v1745
  %v1927 = vmax.f32 %v1431, %v1750
  %v1928 = vmax.f32 %v1432, %v1755
  %v1929 = vmax.f32 %v1433, %v1760
  %v1930 = vmax.f32 %v1434, %v1765
  %v1931 = vmax.f32 %v1435, %v1770
  %v1932 = vmax.f32 %v1436, %v1775
  %v1933 = vmax.f32 %v1437, %v1780
  %v1934 = vmax.f32 %v1438, %v1785
  %v1935 = vmax.f32 %v1439, %v1790
  %v1936 = vmax.f32 %v1440, %v1795
  %v1937 = vmax.f32 %v1441, %v1800
  %v1938 = vmax.f32 %v1442, %v1805
  %v1939 = vmax.f32 %v1443, %v1810
  %v1940 = vmax.f32 %v1444, %v1815
  %v1941 = vmax.f32 %v1445, %v1820
  %v1942 = vmax.f32 %v1446, %v1825
  %v1943 = vmax.f32 %v1447, %v1830
  %v1944 = vmax.f32 %v1448, %v1835
  %v1945 = vmax.f32 %v1449, %v1840
  %v1946 = vmax.f32 %v1450, %v1845
  %v1947 = vmax.f32 %v1451, %v1850
  %v1948 = vmax.f32 %v1452, %v1855
  %v1949 = vmax.f32 %v1453, %v1860
  %v1950 = vmax.f32 %v1454, %v1865
  %v1951 = vmax.f32 %v1455, %v1870
  %v1952 = vmax.f32 %v1456, %v1875
  %v1953 = vmax.f32 %v1457, %v1880
  %v1954 = vmax.f32 %v1458, %v1885
  %v1955 = vmax.f32 %v1459, %v1890
  %v1956 = vmax.f32 %v1460, %v1895
  %v1957 = vmax.f32 %v1461, %v1900
  %v1958 = vmax.f32 %v1462, %v1905
  %v1959 = vmax.f32 %v1463, %v1910
  %v1960 = vmax.f32 %v1464, %v1915
  %v1961 = vld [vmem:[%s2] sm:$0x1]
  %v1963 = vlaneseq
  %v1964 = vshrl.u32 %v1963, 7
  %v1965 = vsub.s32 0, %v1964
  %v1966 = vrot.slane %v1961, %v1965
  %v1968 = vadd.f32 %v1918, %v1966
  %v1969 = vadd.f32 %v1919, %v1966
  %v1970 = vadd.f32 %v1920, %v1966
  %v1971 = vadd.f32 %v1921, %v1966
  %v1972 = vadd.f32 %v1922, %v1966
  %v1973 = vadd.f32 %v1923, %v1966
  %v1974 = vadd.f32 %v1924, %v1966
  %v1975 = vadd.f32 %v1925, %v1966
  %v1976 = vadd.f32 %v1926, %v1966
  %v1977 = vadd.f32 %v1927, %v1966
  %v1978 = vadd.f32 %v1928, %v1966
  %v1979 = vadd.f32 %v1929, %v1966
  %v1980 = vadd.f32 %v1930, %v1966
  %v1981 = vadd.f32 %v1931, %v1966
  %v1982 = vadd.f32 %v1932, %v1966
  %v1983 = vadd.f32 %v1933, %v1966
  %v1984 = vadd.f32 %v1934, %v1966
  %v1985 = vadd.f32 %v1935, %v1966
  %v1986 = vadd.f32 %v1936, %v1966
  %v1987 = vadd.f32 %v1937, %v1966
  %v1988 = vadd.f32 %v1938, %v1966
  %v1989 = vadd.f32 %v1939, %v1966
  %v1990 = vadd.f32 %v1940, %v1966
  %v1991 = vadd.f32 %v1941, %v1966
  %v1992 = vadd.f32 %v1942, %v1966
  %v1993 = vadd.f32 %v1943, %v1966
  %v1994 = vadd.f32 %v1944, %v1966
  %v1995 = vadd.f32 %v1945, %v1966
  %v1996 = vadd.f32 %v1946, %v1966
  %v1997 = vadd.f32 %v1947, %v1966
  %v1998 = vadd.f32 %v1948, %v1966
  %v1999 = vadd.f32 %v1949, %v1966
  %v2000 = vadd.f32 %v1950, %v1966
  %v2001 = vadd.f32 %v1951, %v1966
  %v2002 = vadd.f32 %v1952, %v1966
  %v2003 = vadd.f32 %v1953, %v1966
  %v2004 = vadd.f32 %v1954, %v1966
  %v2005 = vadd.f32 %v1955, %v1966
  %v2006 = vadd.f32 %v1956, %v1966
  %v2007 = vadd.f32 %v1957, %v1966
  %v2008 = vadd.f32 %v1958, %v1966
  %v2009 = vadd.f32 %v1959, %v1966
  %v2010 = vadd.f32 %v1960, %v1966
  %v2011 = vmax.f32 %v1968, 0.0
  %v2012 = vmax.f32 %v1969, 0.0
  %v2013 = vmax.f32 %v1970, 0.0
  %v2014 = vmax.f32 %v1971, 0.0
  %v2015 = vmax.f32 %v1972, 0.0
  %v2016 = vmax.f32 %v1973, 0.0
  %v2017 = vmax.f32 %v1974, 0.0
  %v2018 = vmax.f32 %v1975, 0.0
  %v2019 = vmax.f32 %v1976, 0.0
  %v2020 = vmax.f32 %v1977, 0.0
  %v2021 = vmax.f32 %v1978, 0.0
  %v2022 = vmax.f32 %v1979, 0.0
  %v2023 = vmax.f32 %v1980, 0.0
  %v2024 = vmax.f32 %v1981, 0.0
  %v2025 = vmax.f32 %v1982, 0.0
  %v2026 = vmax.f32 %v1983, 0.0
  %v2027 = vmax.f32 %v1984, 0.0
  %v2028 = vmax.f32 %v1985, 0.0
  %v2029 = vmax.f32 %v1986, 0.0
  %v2030 = vmax.f32 %v1987, 0.0
  %v2031 = vmax.f32 %v1988, 0.0
  %v2032 = vmax.f32 %v1989, 0.0
  %v2033 = vmax.f32 %v1990, 0.0
  %v2034 = vmax.f32 %v1991, 0.0
  %v2035 = vmax.f32 %v1992, 0.0
  %v2036 = vmax.f32 %v1993, 0.0
  %v2037 = vmax.f32 %v1994, 0.0
  %v2038 = vmax.f32 %v1995, 0.0
  %v2039 = vmax.f32 %v1996, 0.0
  %v2040 = vmax.f32 %v1997, 0.0
  %v2041 = vmax.f32 %v1998, 0.0
  %v2042 = vmax.f32 %v1999, 0.0
  %v2043 = vmax.f32 %v2000, 0.0
  %v2044 = vmax.f32 %v2001, 0.0
  %v2045 = vmax.f32 %v2002, 0.0
  %v2046 = vmax.f32 %v2003, 0.0
  %v2047 = vmax.f32 %v2004, 0.0
  %v2048 = vmax.f32 %v2005, 0.0
  %v2049 = vmax.f32 %v2006, 0.0
  %v2050 = vmax.f32 %v2007, 0.0
  %v2051 = vmax.f32 %v2008, 0.0
  %v2052 = vmax.f32 %v2009, 0.0
  %v2053 = vmax.f32 %v2010, 0.0
  %2054 = vst [vmem:[%s3] sm:$0xff] %v2011
  %2055 = vst [vmem:[%s3 + $0x8] sm:$0xff] %v2012
  %2056 = vst [vmem:[%s3 + $0x10] sm:$0xff] %v2013
  %2057 = vst [vmem:[%s3 + $0x18] sm:$0xff] %v2014
  %2058 = vst [vmem:[%s3 + $0x20] sm:$0xff] %v2015
  %2059 = vst [vmem:[%s3 + $0x28] sm:$0xff] %v2016
  %2060 = vst [vmem:[%s3 + $0x30] sm:$0xff] %v2017
  %2061 = vst [vmem:[%s3 + $0x38] sm:$0xff] %v2018
  %2062 = vst [vmem:[%s3 + $0x40] sm:$0xff] %v2019
  %2063 = vst [vmem:[%s3 + $0x48] sm:$0xff] %v2020
  %2064 = vst [vmem:[%s3 + $0x50] sm:$0xff] %v2021
  %2065 = vst [vmem:[%s3 + $0x58] sm:$0xff] %v2022
  %2066 = vst [vmem:[%s3 + $0x60] sm:$0xff] %v2023
  %2067 = vst [vmem:[%s3 + $0x68] sm:$0xff] %v2024
  %2068 = vst [vmem:[%s3 + $0x70] sm:$0xff] %v2025
  %2069 = vst [vmem:[%s3 + $0x78] sm:$0xff] %v2026
  %2070 = vst [vmem:[%s3 + $0x80] sm:$0xff] %v2027
  %2071 = vst [vmem:[%s3 + $0x88] sm:$0xff] %v2028
  %2072 = vst [vmem:[%s3 + $0x90] sm:$0xff] %v2029
  %2073 = vst [vmem:[%s3 + $0x98] sm:$0xff] %v2030
  %2074 = vst [vmem:[%s3 + $0xa0] sm:$0xff] %v2031
  %2075 = vst [vmem:[%s3 + $0xa8] sm:$0xff] %v2032
  %2076 = vst [vmem:[%s3 + $0xb0] sm:$0xff] %v2033
  %2077 = vst [vmem:[%s3 + $0xb8] sm:$0xff] %v2034
  %2078 = vst [vmem:[%s3 + $0xc0] sm:$0xff] %v2035
  %2079 = vst [vmem:[%s3 + $0xc8] sm:$0xff] %v2036
  %2080 = vst [vmem:[%s3 + $0xd0] sm:$0xff] %v2037
  %2081 = vst [vmem:[%s3 + $0xd8] sm:$0xff] %v2038
  %2082 = vst [vmem:[%s3 + $0xe0] sm:$0xff] %v2039
  %2083 = vst [vmem:[%s3 + $0xe8] sm:$0xff] %v2040
  %2084 = vst [vmem:[%s3 + $0xf0] sm:$0xff] %v2041
  %2085 = vst [vmem:[%s3 + $0xf8] sm:$0xff] %v2042
  %2086 = vst [vmem:[%s3 + $0x100] sm:$0xff] %v2043
  %2087 = vst [vmem:[%s3 + $0x108] sm:$0xff] %v2044
  %2088 = vst [vmem:[%s3 + $0x110] sm:$0xff] %v2045
  %2089 = vst [vmem:[%s3 + $0x118] sm:$0xff] %v2046
  %2090 = vst [vmem:[%s3 + $0x120] sm:$0xff] %v2047
  %2091 = vst [vmem:[%s3 + $0x128] sm:$0xff] %v2048
  %2092 = vst [vmem:[%s3 + $0x130] sm:$0xff] %v2049
  %2093 = vst [vmem:[%s3 + $0x138] sm:$0xff] %v2050
  %2094 = vst [vmem:[%s3 + $0x140] sm:$0xff] %v2051
  %2095 = vst [vmem:[%s3 + $0x148] sm:$0xff] %v2052
  %2096 = vst [vmem:[%s3 + $0x150] sm:$0x3] %v2053
  // Predicated region
  $region14: #{simple_cnn_forward.3} parent=0 // pred_check
    _
  $region15: #{simple_cnn_forward.3} parent=0 // pred_check_branch
    %2098 = sbr.rel (0) target = $region17
  $region16: #{simple_cnn_forward.3} parent=0 // pred_region
    _
  $region17: #{simple_cnn_forward.3} parent=0 // pred_fallthru
    _
  // Predicated region
  $region18: #{simple_cnn_forward.3} parent=0 // pred_check
    _
  $region19: #{simple_cnn_forward.3} parent=0 // pred_check_branch
    %2100 = sbr.rel (0) target = $region21
  $region20: #{simple_cnn_forward.3} parent=0 // pred_region
    _
  $region21: #{simple_cnn_forward.3} parent=0 // pred_fallthru
    _

// kernel: simple_cnn_forward.5
$region0: #{simple_cnn_forward.5}
  #allocation0 [shape = 'u32[]', space=smem, size = 0x4, offset = 0x4, fixed_abs, tag = 'smem constant byte address 0x4 - core index']
  #allocation1 [shape = 'u32[144,128]{1,0:T(1,128)}', space=vmem, size = 0x12000, scoped, tag = 'internal scratch']
  %s0 = inlined_call_operand.vmem [shape: f32[2,500], index: 0, kind: input, shape index: {}]
  %s1 = inlined_call_operand.vmem [shape: f32[500,128], index: 1, kind: input, shape index: {}]
  %s2 = inlined_call_operand.vmem [shape: f32[1,128], index: 2, kind: input, shape index: {}]
  %s3 = inlined_call_operand.vmem [shape: f32[128,128], index: 3, kind: input, shape index: {}]
  %s4 = inlined_call_operand.vmem [shape: f32[1,128], index: 4, kind: input, shape index: {}]
  %s5 = inlined_call_operand.hbm [shape: f32[2,128], index: 5, kind: output, shape index: {}]
  %s6 = sld [smem:[#allocation0]]
  $region30: #{simple_cnn_forward.5} parent=0
    _
  %s8 = ssub.s32 1, %s6
  %s9 = scalar_select 0, %s8, %s6
  $region1: #{simple_cnn_forward.5} parent=0
    #allocation2 [shape = 'u8[1024]{0}', space=vmem, size = 0x400, scoped, tag = 'output window, operand 0, single buffered']
    #allocation3 [shape = 's32[1]{0}', space=sflag, size = 0x4, scoped, tag = 'scoped memory for simple_cnn_forward.5']
    %10 = vsyncpa [#allocation3], 0
    // Predicated region
    $region2: #{simple_cnn_forward.5} parent=1 // pred_check
      _
    $region3: #{simple_cnn_forward.5} parent=1 // pred_check_branch
      %12 = sbr.rel (0) target = $region5
    $region4: #{simple_cnn_forward.5} parent=1 // pred_region
      _
    $region5: #{simple_cnn_forward.5} parent=1 // pred_fallthru
      _
    // Predicated region
    $region6: #{simple_cnn_forward.5} parent=1 // pred_check
      _
    $region7: #{simple_cnn_forward.5} parent=1 // pred_check_branch
      %14 = sbr.rel (0) target = $region9
    $region8: #{simple_cnn_forward.5} parent=1 // pred_region
      _
    $region9: #{simple_cnn_forward.5} parent=1 // pred_fallthru
      _
    // Predicated region
    $region10: #{simple_cnn_forward.5} parent=1 // pred_check
      _
    $region11: #{simple_cnn_forward.5} parent=1 // pred_check_branch
      %16 = sbr.rel (0) target = $region13
    $region12: #{simple_cnn_forward.5} parent=1 // pred_region
      _
    $region13: #{simple_cnn_forward.5} parent=1 // pred_fallthru
      _
    // Predicated region
    $region14: #{simple_cnn_forward.5} parent=1 // pred_check
      _
    $region15: #{simple_cnn_forward.5} parent=1 // pred_check_branch
      %18 = sbr.rel (0) target = $region17
    $region16: #{simple_cnn_forward.5} parent=1 // pred_region
      _
    $region17: #{simple_cnn_forward.5} parent=1 // pred_fallthru
      _
    // Predicated region
    $region18: #{simple_cnn_forward.5} parent=1 // pred_check
      _
    $region19: #{simple_cnn_forward.5} parent=1 // pred_check_branch
      %20 = sbr.rel (0) target = $region21
    $region20: #{simple_cnn_forward.5} parent=1 // pred_region
      _
    $region21: #{simple_cnn_forward.5} parent=1 // pred_fallthru
      _
    %v21 = vld [vmem:[%s0] sm:$0xff]
    %v22 = vld [vmem:[%s1] sm:$0xff]
    %v23 = vld [vmem:[%s1 + $0x8] sm:$0xff]
    %v24 = vld [vmem:[%s1 + $0x10] sm:$0xff]
    %v25 = vld [vmem:[%s1 + $0x18] sm:$0xff]
    %v26 = vld [vmem:[%s1 + $0x20] sm:$0xff]
    %v27 = vld [vmem:[%s1 + $0x28] sm:$0xff]
    %v28 = vld [vmem:[%s1 + $0x30] sm:$0xff]
    %v29 = vld [vmem:[%s1 + $0x38] sm:$0xff]
    %v30 = vld [vmem:[%s1 + $0x40] sm:$0xff]
    %v31 = vld [vmem:[%s1 + $0x48] sm:$0xff]
    %v32 = vld [vmem:[%s1 + $0x50] sm:$0xff]
    %v33 = vld [vmem:[%s1 + $0x58] sm:$0xff]
    %v34 = vld [vmem:[%s1 + $0x60] sm:$0xff]
    %v35 = vld [vmem:[%s1 + $0x68] sm:$0xff]
    %v36 = vld [vmem:[%s1 + $0x70] sm:$0xff]
    %v37 = vld [vmem:[%s1 + $0x78] sm:$0xff]
    %v38 = vld [vmem:[%s1 + $0x80] sm:$0xff]
    %v39 = vld [vmem:[%s1 + $0x88] sm:$0xff]
    %v40 = vld [vmem:[%s1 + $0x90] sm:$0xff]
    %v41 = vld [vmem:[%s1 + $0x98] sm:$0xff]
    %v42 = vld [vmem:[%s1 + $0xa0] sm:$0xff]
    %v43 = vld [vmem:[%s1 + $0xa8] sm:$0xff]
    %v44 = vld [vmem:[%s1 + $0xb0] sm:$0xff]
    %v45 = vld [vmem:[%s1 + $0xb8] sm:$0xff]
    %v46 = vld [vmem:[%s1 + $0xc0] sm:$0xff]
    %v47 = vld [vmem:[%s1 + $0xc8] sm:$0xff]
    %v48 = vld [vmem:[%s1 + $0xd0] sm:$0xff]
    %v49 = vld [vmem:[%s1 + $0xd8] sm:$0xff]
    %v50 = vld [vmem:[%s1 + $0xe0] sm:$0xff]
    %v51 = vld [vmem:[%s1 + $0xe8] sm:$0xff]
    %v52 = vld [vmem:[%s1 + $0xf0] sm:$0xff]
    %v53 = vld [vmem:[%s1 + $0xf8] sm:$0xff]
    %v54 = vld [vmem:[%s1 + $0x100] sm:$0xff]
    %v55 = vld [vmem:[%s1 + $0x108] sm:$0xff]
    %v56 = vld [vmem:[%s1 + $0x110] sm:$0xff]
    %v57 = vld [vmem:[%s1 + $0x118] sm:$0xff]
    %v58 = vld [vmem:[%s1 + $0x120] sm:$0xff]
    %v59 = vld [vmem:[%s1 + $0x128] sm:$0xff]
    %v60 = vld [vmem:[%s1 + $0x130] sm:$0xff]
    %v61 = vld [vmem:[%s1 + $0x138] sm:$0xff]
    %v62 = vld [vmem:[%s1 + $0x140] sm:$0xff]
    %v63 = vld [vmem:[%s1 + $0x148] sm:$0xff]
    %v64 = vld [vmem:[%s1 + $0x150] sm:$0xff]
    %v65 = vld [vmem:[%s1 + $0x158] sm:$0xff]
    %v66 = vld [vmem:[%s1 + $0x160] sm:$0xff]
    %v67 = vld [vmem:[%s1 + $0x168] sm:$0xff]
    %v68 = vld [vmem:[%s1 + $0x170] sm:$0xff]
    %v69 = vld [vmem:[%s1 + $0x178] sm:$0xff]
    %v70 = vld [vmem:[%s1 + $0x180] sm:$0xff]
    %v71 = vld [vmem:[%s1 + $0x188] sm:$0xff]
    %v72 = vld [vmem:[%s1 + $0x190] sm:$0xff]
    %v73 = vld [vmem:[%s1 + $0x198] sm:$0xff]
    %v74 = vld [vmem:[%s1 + $0x1a0] sm:$0xff]
    %v75 = vld [vmem:[%s1 + $0x1a8] sm:$0xff]
    %v76 = vld [vmem:[%s1 + $0x1b0] sm:$0xff]
    %v77 = vld [vmem:[%s1 + $0x1b8] sm:$0xff]
    %v78 = vld [vmem:[%s1 + $0x1c0] sm:$0xff]
    %v79 = vld [vmem:[%s1 + $0x1c8] sm:$0xff]
    %v80 = vld [vmem:[%s1 + $0x1d0] sm:$0xff]
    %v81 = vld [vmem:[%s1 + $0x1d8] sm:$0xff]
    %v82 = vld [vmem:[%s1 + $0x1e0] sm:$0xff]
    %v83 = vld [vmem:[%s1 + $0x1e8] sm:$0xff]
    %v84 = vld [vmem:[%s1 + $0x1f0] sm:$0xf]
    %v85 = vld [vmem:[%s2] sm:$0x1]
    %v87 = vlaneseq
    %v88 = vshrl.u32 %v87, 7
    %v89 = vsub.s32 0, %v88
    %v90 = vrot.slane %v85, %v89
    %v93 = vcombine.high %v21, %v21
    %v95 = vunpack.c.l.s4 1983009808
    %v96 = vunpack.c.0.s8 %v95
    %v97 = vlaneseq
    %v98 = vshrl.u32 %v97, 7
    %v99 = vsub.s32 %v96, %v98
    %v100 = vrot.slane %v21, %v99
    %v102 = vunpack.c.l.s4 1983009808
    %v103 = vunpack.c.0.s8 %v102
    %v104 = vlaneseq
    %v105 = vshrl.u32 %v104, 7
    %v106 = vsub.s32 %v103, %v105
    %v107 = vrot.slane %v93, %v106
    %v108 = vcombine.high %v100, %v100
    %v109 = vcombine.high %v107, %v107
    %vm113 = vcmask 949248
    %v114 = vsel %vm113, %v109, 0
    %vm116 = vcmask 1043456
    %v118 = vsel %vm116, %v84, 0
    %120 = vmatprep.subr.mxu0 0.0
    %121 = vmatpush1.msra.mxu0 %v37
    %122 = vmatprep.subr.mxu0 0.0
    %123 = vmatpush1.msra.mxu0 %v36
    %124 = vmatprep.subr.mxu0 0.0
    %125 = vmatpush1.msra.mxu0 %v35
    %126 = vmatprep.subr.mxu0 0.0
    %127 = vmatpush1.msra.mxu0 %v34
    %128 = vmatprep.subr.mxu0 0.0
    %129 = vmatpush1.msra.mxu0 %v33
    %130 = vmatprep.subr.mxu0 0.0
    %131 = vmatpush1.msra.mxu0 %v32
    %132 = vmatprep.subr.mxu0 0.0
    %133 = vmatpush1.msra.mxu0 %v31
    %134 = vmatprep.subr.mxu0 0.0
    %135 = vmatpush1.msra.mxu0 %v30
    %136 = vmatprep.subr.mxu0 0.0
    %137 = vmatpush1.msra.mxu0 %v29
    %138 = vmatprep.subr.mxu0 0.0
    %139 = vmatpush1.msra.mxu0 %v28
    %140 = vmatprep.subr.mxu0 0.0
    %141 = vmatpush1.msra.mxu0 %v27
    %142 = vmatprep.subr.mxu0 0.0
    %143 = vmatpush1.msra.mxu0 %v26
    %144 = vmatprep.subr.mxu0 0.0
    %145 = vmatpush1.msra.mxu0 %v25
    %146 = vmatprep.subr.mxu0 0.0
    %147 = vmatpush1.msra.mxu0 %v24
    %148 = vmatprep.subr.mxu0 0.0
    %149 = vmatpush1.msra.mxu0 %v23
    %150 = vmatprep.subr.mxu0 0.0
    %151 = vmatpush1.msra.mxu0 %v22
    %152 = vmatprep.subr.mxu0 0.0
    %153 = vmatpush2.msra.mxu0 %v53
    %154 = vmatprep.subr.mxu0 0.0
    %155 = vmatpush2.msra.mxu0 %v52
    %156 = vmatprep.subr.mxu0 0.0
    %157 = vmatpush2.msra.mxu0 %v51
    %158 = vmatprep.subr.mxu0 0.0
    %159 = vmatpush2.msra.mxu0 %v50
    %160 = vmatprep.subr.mxu0 0.0
    %161 = vmatpush2.msra.mxu0 %v49
    %162 = vmatprep.subr.mxu0 0.0
    %163 = vmatpush2.msra.mxu0 %v48
    %164 = vmatprep.subr.mxu0 0.0
    %165 = vmatpush2.msra.mxu0 %v47
    %166 = vmatprep.subr.mxu0 0.0
    %167 = vmatpush2.msra.mxu0 %v46
    %168 = vmatprep.subr.mxu0 0.0
    %169 = vmatpush2.msra.mxu0 %v45
    %170 = vmatprep.subr.mxu0 0.0
    %171 = vmatpush2.msra.mxu0 %v44
    %172 = vmatprep.subr.mxu0 0.0
    %173 = vmatpush2.msra.mxu0 %v43
    %174 = vmatprep.subr.mxu0 0.0
    %175 = vmatpush2.msra.mxu0 %v42
    %176 = vmatprep.subr.mxu0 0.0
    %177 = vmatpush2.msra.mxu0 %v41
    %178 = vmatprep.subr.mxu0 0.0
    %179 = vmatpush2.msra.mxu0 %v40
    %180 = vmatprep.subr.mxu0 0.0
    %181 = vmatpush2.msra.mxu0 %v39
    %182 = vmatprep.subr.mxu0 0.0
    %183 = vmatpush2.msra.mxu0 %v38
    %184 = vmatprep.mubr.f32.mxu0 %v108
    %185 = vmatmul.mubr.f32.gmra.mxu0 %v100
    %v186 = vpop.f32.mrf.mxu0
    %v187 = vadd.f32 %v90, %v186
    %v188 = vpop.f32.mrf.mxu0
    %189 = vdwg.mxu0
    %190 = vmatprep.subr.mxu0 0.0
    %191 = vmatpush1.msra.mxu0 %v69
    %192 = vmatprep.subr.mxu0 0.0
    %193 = vmatpush1.msra.mxu0 %v68
    %194 = vmatprep.subr.mxu0 0.0
    %195 = vmatpush1.msra.mxu0 %v67
    %196 = vmatprep.subr.mxu0 0.0
    %197 = vmatpush1.msra.mxu0 %v66
    %198 = vmatprep.subr.mxu0 0.0
    %199 = vmatpush1.msra.mxu0 %v65
    %200 = vmatprep.subr.mxu0 0.0
    %201 = vmatpush1.msra.mxu0 %v64
    %202 = vmatprep.subr.mxu0 0.0
    %203 = vmatpush1.msra.mxu0 %v63
    %204 = vmatprep.subr.mxu0 0.0
    %205 = vmatpush1.msra.mxu0 %v62
    %206 = vmatprep.subr.mxu0 0.0
    %207 = vmatpush1.msra.mxu0 %v61
    %208 = vmatprep.subr.mxu0 0.0
    %209 = vmatpush1.msra.mxu0 %v60
    %210 = vmatprep.subr.mxu0 0.0
    %211 = vmatpush1.msra.mxu0 %v59
    %212 = vmatprep.subr.mxu0 0.0
    %213 = vmatpush1.msra.mxu0 %v58
    %214 = vmatprep.subr.mxu0 0.0
    %215 = vmatpush1.msra.mxu0 %v57
    %216 = vmatprep.subr.mxu0 0.0
    %217 = vmatpush1.msra.mxu0 %v56
    %218 = vmatprep.subr.mxu0 0.0
    %219 = vmatpush1.msra.mxu0 %v55
    %220 = vmatprep.subr.mxu0 0.0
    %221 = vmatpush1.msra.mxu0 %v54
    %222 = vmatprep.subr.mxu0 0.0
    %223 = vmatpush2.msra.mxu0 0.0
    %224 = vmatprep.subr.mxu0 0.0
    %225 = vmatpush2.msra.mxu0 %v118
    %226 = vmatprep.subr.mxu0 0.0
    %227 = vmatpush2.msra.mxu0 %v83
    %228 = vmatprep.subr.mxu0 0.0
    %229 = vmatpush2.msra.mxu0 %v82
    %230 = vmatprep.subr.mxu0 0.0
    %231 = vmatpush2.msra.mxu0 %v81
    %232 = vmatprep.subr.mxu0 0.0
    %233 = vmatpush2.msra.mxu0 %v80
    %234 = vmatprep.subr.mxu0 0.0
    %235 = vmatpush2.msra.mxu0 %v79
    %236 = vmatprep.subr.mxu0 0.0
    %237 = vmatpush2.msra.mxu0 %v78
    %238 = vmatprep.subr.mxu0 0.0
    %239 = vmatpush2.msra.mxu0 %v77
    %240 = vmatprep.subr.mxu0 0.0
    %241 = vmatpush2.msra.mxu0 %v76
    %242 = vmatprep.subr.mxu0 0.0
    %243 = vmatpush2.msra.mxu0 %v75
    %244 = vmatprep.subr.mxu0 0.0
    %245 = vmatpush2.msra.mxu0 %v74
    %246 = vmatprep.subr.mxu0 0.0
    %247 = vmatpush2.msra.mxu0 %v73
    %248 = vmatprep.subr.mxu0 0.0
    %249 = vmatpush2.msra.mxu0 %v72
    %250 = vmatprep.subr.mxu0 0.0
    %251 = vmatpush2.msra.mxu0 %v71
    %252 = vmatprep.subr.mxu0 0.0
    %253 = vmatpush2.msra.mxu0 %v70
    %254 = vmatprep.mubr.f32.mxu0 %v114
    %255 = vmatmul.mubr.f32.gmra.mxu0 %v107
    %v256 = vpop.f32.mrf.mxu0
    %v257 = vadd.f32 %v187, %v256
    %v258 = vpop.f32.mrf.mxu0
    %259 = vdwg.mxu0
    %v260 = vmax.f32 %v257, 0.0
    %v261 = vld [vmem:[%s3] sm:$0xff]
    %v262 = vld [vmem:[%s3 + $0x8] sm:$0xff]
    %v263 = vld [vmem:[%s3 + $0x10] sm:$0xff]
    %v264 = vld [vmem:[%s3 + $0x18] sm:$0xff]
    %v265 = vld [vmem:[%s3 + $0x20] sm:$0xff]
    %v266 = vld [vmem:[%s3 + $0x28] sm:$0xff]
    %v267 = vld [vmem:[%s3 + $0x30] sm:$0xff]
    %v268 = vld [vmem:[%s3 + $0x38] sm:$0xff]
    %v269 = vld [vmem:[%s3 + $0x40] sm:$0xff]
    %v270 = vld [vmem:[%s3 + $0x48] sm:$0xff]
    %v271 = vld [vmem:[%s3 + $0x50] sm:$0xff]
    %v272 = vld [vmem:[%s3 + $0x58] sm:$0xff]
    %v273 = vld [vmem:[%s3 + $0x60] sm:$0xff]
    %v274 = vld [vmem:[%s3 + $0x68] sm:$0xff]
    %v275 = vld [vmem:[%s3 + $0x70] sm:$0xff]
    %v276 = vld [vmem:[%s3 + $0x78] sm:$0xff]
    %v277 = vld [vmem:[%s4] sm:$0x1]
    %v279 = vlaneseq
    %v280 = vshrl.u32 %v279, 7
    %v281 = vsub.s32 0, %v280
    %v282 = vrot.slane %v277, %v281
    %284 = vmatprep.subr.mxu0 0.0
    %285 = vmatpush1.msra.mxu0 %v276
    %286 = vmatprep.subr.mxu0 0.0
    %287 = vmatpush1.msra.mxu0 %v275
    %288 = vmatprep.subr.mxu0 0.0
    %289 = vmatpush1.msra.mxu0 %v274
    %290 = vmatprep.subr.mxu0 0.0
    %291 = vmatpush1.msra.mxu0 %v273
    %292 = vmatprep.subr.mxu0 0.0
    %293 = vmatpush1.msra.mxu0 %v272
    %294 = vmatprep.subr.mxu0 0.0
    %295 = vmatpush1.msra.mxu0 %v271
    %296 = vmatprep.subr.mxu0 0.0
    %297 = vmatpush1.msra.mxu0 %v270
    %298 = vmatprep.subr.mxu0 0.0
    %299 = vmatpush1.msra.mxu0 %v269
    %300 = vmatprep.subr.mxu0 0.0
    %301 = vmatpush1.msra.mxu0 %v268
    %302 = vmatprep.subr.mxu0 0.0
    %303 = vmatpush1.msra.mxu0 %v267
    %304 = vmatprep.subr.mxu0 0.0
    %305 = vmatpush1.msra.mxu0 %v266
    %306 = vmatprep.subr.mxu0 0.0
    %307 = vmatpush1.msra.mxu0 %v265
    %308 = vmatprep.subr.mxu0 0.0
    %309 = vmatpush1.msra.mxu0 %v264
    %310 = vmatprep.subr.mxu0 0.0
    %311 = vmatpush1.msra.mxu0 %v263
    %312 = vmatprep.subr.mxu0 0.0
    %313 = vmatpush1.msra.mxu0 %v262
    %314 = vmatprep.subr.mxu0 0.0
    %315 = vmatpush1.msra.mxu0 %v261
    %316 = vmatprep.subr.mxu0 0.0
    %317 = vmatpush2.msra.mxu0 0.0
    %318 = vmatprep.subr.mxu0 0.0
    %319 = vmatpush2.msra.mxu0 0.0
    %320 = vmatprep.subr.mxu0 0.0
    %321 = vmatpush2.msra.mxu0 0.0
    %322 = vmatprep.subr.mxu0 0.0
    %323 = vmatpush2.msra.mxu0 0.0
    %324 = vmatprep.subr.mxu0 0.0
    %325 = vmatpush2.msra.mxu0 0.0
    %326 = vmatprep.subr.mxu0 0.0
    %327 = vmatpush2.msra.mxu0 0.0
    %328 = vmatprep.subr.mxu0 0.0
    %329 = vmatpush2.msra.mxu0 0.0
    %330 = vmatprep.subr.mxu0 0.0
    %331 = vmatpush2.msra.mxu0 0.0
    %332 = vmatprep.subr.mxu0 0.0
    %333 = vmatpush2.msra.mxu0 0.0
    %334 = vmatprep.subr.mxu0 0.0
    %335 = vmatpush2.msra.mxu0 0.0
    %336 = vmatprep.subr.mxu0 0.0
    %337 = vmatpush2.msra.mxu0 0.0
    %338 = vmatprep.subr.mxu0 0.0
    %339 = vmatpush2.msra.mxu0 0.0
    %340 = vmatprep.subr.mxu0 0.0
    %341 = vmatpush2.msra.mxu0 0.0
    %342 = vmatprep.subr.mxu0 0.0
    %343 = vmatpush2.msra.mxu0 0.0
    %344 = vmatprep.subr.mxu0 0.0
    %345 = vmatpush2.msra.mxu0 0.0
    %346 = vmatprep.subr.mxu0 0.0
    %347 = vmatpush2.msra.mxu0 0.0
    %348 = vmatprep.mubr.f32.mxu0 0.0
    %349 = vmatmul.mubr.f32.gmra.mxu0 %v260
    %v350 = vpop.f32.mrf.mxu0
    %v351 = vadd.f32 %v282, %v350
    %v352 = vpop.f32.mrf.mxu0
    %353 = vdwg.mxu0
    %354 = vst [vmem:[#allocation2] sm:$0x3] %v351
    // Predicated region
    $region22: #{simple_cnn_forward.5} parent=1 // pred_check
      _
    $region23: #{simple_cnn_forward.5} parent=1 // pred_check_branch
      %356 = sbr.rel (0) target = $region25
    $region24: #{simple_cnn_forward.5} parent=1 // pred_region
      %s358 = ssub.s32 32, 32
      %359 = vsyncadd [#allocation3], %s358
      %s361 = sshll.u32 [#allocation2], 4
      %s362 = int_to_ptr.vmem [resolvable:$true] %s361
      %364 = dma.vmem_to_hbm [thread:$0]  %s362, 32, %s5, [#allocation3]
    $region25: #{simple_cnn_forward.5} parent=1 // pred_fallthru
      _
    // Predicated region
    $region26: #{simple_cnn_forward.5} parent=1 // pred_check
      _
    $region27: #{simple_cnn_forward.5} parent=1 // pred_check_branch
      %366 = sbr.rel (0) target = $region29
    $region28: #{simple_cnn_forward.5} parent=1 // pred_region
      %367 = dma.done [#allocation3], 32
    $region29: #{simple_cnn_forward.5} parent=1 // pred_fallthru
      _
    %368 = vsyncpa [#allocation3], 1

// kernel: simple_cnn_forward.4
$region0: #{simple_cnn_forward.4}
  #allocation0 [shape = 'u32[]', space=smem, size = 0x4, offset = 0x4, fixed_abs, tag = 'smem constant byte address 0x4 - core index']
  #allocation1 [shape = 'u32[144,128]{1,0:T(1,128)}', space=vmem, size = 0x12000, scoped, tag = 'internal scratch']
  %s0 = inlined_call_operand.vmem [shape: f32[4,50,90], index: 0, kind: input, shape index: {}]
  %s1 = inlined_call_operand.vmem [shape: f32[90,128], index: 1, kind: input, shape index: {}]
  %s2 = inlined_call_operand.vmem [shape: f32[1,128], index: 2, kind: input, shape index: {}]
  %s3 = inlined_call_operand.vmem [shape: f32[50,128], index: 3, kind: output, shape index: {}]
  %s4 = sld [smem:[#allocation0]]
  $region22: #{simple_cnn_forward.4} parent=0
    _
  %s6 = ssub.s32 1, %s4
  %s7 = scalar_select 0, %s6, %s4
  // Predicated region
  $region2: #{simple_cnn_forward.4} parent=0 // pred_check
    _
  $region3: #{simple_cnn_forward.4} parent=0 // pred_check_branch
    %9 = sbr.rel (0) target = $region5
  $region4: #{simple_cnn_forward.4} parent=0 // pred_region
    _
  $region5: #{simple_cnn_forward.4} parent=0 // pred_fallthru
    _
  // Predicated region
  $region6: #{simple_cnn_forward.4} parent=0 // pred_check
    _
  $region7: #{simple_cnn_forward.4} parent=0 // pred_check_branch
    %11 = sbr.rel (0) target = $region9
  $region8: #{simple_cnn_forward.4} parent=0 // pred_region
    _
  $region9: #{simple_cnn_forward.4} parent=0 // pred_fallthru
    _
  // Predicated region
  $region10: #{simple_cnn_forward.4} parent=0 // pred_check
    _
  $region11: #{simple_cnn_forward.4} parent=0 // pred_check_branch
    %13 = sbr.rel (0) target = $region13
  $region12: #{simple_cnn_forward.4} parent=0 // pred_region
    _
  $region13: #{simple_cnn_forward.4} parent=0 // pred_fallthru
    _
  %v14 = vld [vmem:[%s1] sm:$0xff]
  %v15 = vld [vmem:[%s1 + $0x8] sm:$0xff]
  %v16 = vld [vmem:[%s1 + $0x10] sm:$0xff]
  %v17 = vld [vmem:[%s1 + $0x18] sm:$0xff]
  %v18 = vld [vmem:[%s1 + $0x20] sm:$0xff]
  %v19 = vld [vmem:[%s1 + $0x28] sm:$0xff]
  %v20 = vld [vmem:[%s1 + $0x30] sm:$0xff]
  %v21 = vld [vmem:[%s1 + $0x38] sm:$0xff]
  %v22 = vld [vmem:[%s1 + $0x40] sm:$0xff]
  %v23 = vld [vmem:[%s1 + $0x48] sm:$0xff]
  %v24 = vld [vmem:[%s1 + $0x50] sm:$0xff]
  %v25 = vld [vmem:[%s1 + $0x58] sm:$0x3]
  %v26 = vld [vmem:[%s0] sm:$0xff]
  %v27 = vld [vmem:[%s0 + $0x8] sm:$0xff]
  %v28 = vld [vmem:[%s0 + $0x10] sm:$0xff]
  %v29 = vld [vmem:[%s0 + $0x18] sm:$0xff]
  %v30 = vld [vmem:[%s0 + $0x20] sm:$0xff]
  %v31 = vld [vmem:[%s0 + $0x28] sm:$0xff]
  %v32 = vld [vmem:[%s0 + $0x30] sm:$0x3]
  %vm33 = vcmask 736256
  %v35 = vsel %vm33, %v26, 0
  %v38 = vsel %vm33, %v27, 0
  %v41 = vsel %vm33, %v28, 0
  %v44 = vsel %vm33, %v29, 0
  %v47 = vsel %vm33, %v30, 0
  %v50 = vsel %vm33, %v31, 0
  %v53 = vsel %vm33, %v32, 0
  %vm55 = vcmask 1041408
  %v57 = vsel %vm55, %v25, 0
  %59 = vmatprep.subr.mxu0 0.0
  %60 = vmatpush1.msra.mxu0 0.0
  %61 = vmatprep.subr.mxu0 0.0
  %62 = vmatpush1.msra.mxu0 0.0
  %63 = vmatprep.subr.mxu0 0.0
  %64 = vmatpush1.msra.mxu0 0.0
  %65 = vmatprep.subr.mxu0 0.0
  %66 = vmatpush1.msra.mxu0 0.0
  %67 = vmatprep.subr.mxu0 0.0
  %68 = vmatpush1.msra.mxu0 %v57
  %69 = vmatprep.subr.mxu0 0.0
  %70 = vmatpush1.msra.mxu0 %v24
  %71 = vmatprep.subr.mxu0 0.0
  %72 = vmatpush1.msra.mxu0 %v23
  %73 = vmatprep.subr.mxu0 0.0
  %74 = vmatpush1.msra.mxu0 %v22
  %75 = vmatprep.subr.mxu0 0.0
  %76 = vmatpush1.msra.mxu0 %v21
  %77 = vmatprep.subr.mxu0 0.0
  %78 = vmatpush1.msra.mxu0 %v20
  %79 = vmatprep.subr.mxu0 0.0
  %80 = vmatpush1.msra.mxu0 %v19
  %81 = vmatprep.subr.mxu0 0.0
  %82 = vmatpush1.msra.mxu0 %v18
  %83 = vmatprep.subr.mxu0 0.0
  %84 = vmatpush1.msra.mxu0 %v17
  %85 = vmatprep.subr.mxu0 0.0
  %86 = vmatpush1.msra.mxu0 %v16
  %87 = vmatprep.subr.mxu0 0.0
  %88 = vmatpush1.msra.mxu0 %v15
  %89 = vmatprep.subr.mxu0 0.0
  %90 = vmatpush1.msra.mxu0 %v14
  %91 = vmatprep.subr.mxu0 0.0
  %92 = vmatpush2.msra.mxu0 0.0
  %93 = vmatprep.subr.mxu0 0.0
  %94 = vmatpush2.msra.mxu0 0.0
  %95 = vmatprep.subr.mxu0 0.0
  %96 = vmatpush2.msra.mxu0 0.0
  %97 = vmatprep.subr.mxu0 0.0
  %98 = vmatpush2.msra.mxu0 0.0
  %99 = vmatprep.subr.mxu0 0.0
  %100 = vmatpush2.msra.mxu0 0.0
  %101 = vmatprep.subr.mxu0 0.0
  %102 = vmatpush2.msra.mxu0 0.0
  %103 = vmatprep.subr.mxu0 0.0
  %104 = vmatpush2.msra.mxu0 0.0
  %105 = vmatprep.subr.mxu0 0.0
  %106 = vmatpush2.msra.mxu0 0.0
  %107 = vmatprep.subr.mxu0 0.0
  %108 = vmatpush2.msra.mxu0 0.0
  %109 = vmatprep.subr.mxu0 0.0
  %110 = vmatpush2.msra.mxu0 0.0
  %111 = vmatprep.subr.mxu0 0.0
  %112 = vmatpush2.msra.mxu0 0.0
  %113 = vmatprep.subr.mxu0 0.0
  %114 = vmatpush2.msra.mxu0 0.0
  %115 = vmatprep.subr.mxu0 0.0
  %116 = vmatpush2.msra.mxu0 0.0
  %117 = vmatprep.subr.mxu0 0.0
  %118 = vmatpush2.msra.mxu0 0.0
  %119 = vmatprep.subr.mxu0 0.0
  %120 = vmatpush2.msra.mxu0 0.0
  %121 = vmatprep.subr.mxu0 0.0
  %122 = vmatpush2.msra.mxu0 0.0
  %123 = vmatprep.mubr.f32.mxu0 0.0
  %124 = vmatmul.mubr.f32.gmra.mxu0 %v35
  %v125 = vpop.f32.mrf.mxu0
  %v126 = vadd.f32 0.0, %v125
  %v127 = vpop.f32.mrf.mxu0
  %128 = vmatprep.mubr.f32.mxu0 0.0
  %129 = vmatmul.mubr.f32.gmra.mxu0 %v38
  %v130 = vpop.f32.mrf.mxu0
  %v131 = vadd.f32 0.0, %v130
  %v132 = vpop.f32.mrf.mxu0
  %133 = vmatprep.mubr.f32.mxu0 0.0
  %134 = vmatmul.mubr.f32.gmra.mxu0 %v41
  %v135 = vpop.f32.mrf.mxu0
  %v136 = vadd.f32 0.0, %v135
  %v137 = vpop.f32.mrf.mxu0
  %138 = vmatprep.mubr.f32.mxu0 0.0
  %139 = vmatmul.mubr.f32.gmra.mxu0 %v44
  %v140 = vpop.f32.mrf.mxu0
  %v141 = vadd.f32 0.0, %v140
  %v142 = vpop.f32.mrf.mxu0
  %143 = vmatprep.mubr.f32.mxu0 0.0
  %144 = vmatmul.mubr.f32.gmra.mxu0 %v47
  %v145 = vpop.f32.mrf.mxu0
  %v146 = vadd.f32 0.0, %v145
  %v147 = vpop.f32.mrf.mxu0
  %148 = vmatprep.mubr.f32.mxu0 0.0
  %149 = vmatmul.mubr.f32.gmra.mxu0 %v50
  %v150 = vpop.f32.mrf.mxu0
  %v151 = vadd.f32 0.0, %v150
  %v152 = vpop.f32.mrf.mxu0
  %153 = vmatprep.mubr.f32.mxu0 0.0
  %154 = vmatmul.mubr.f32.gmra.mxu0 %v53
  %v155 = vpop.f32.mrf.mxu0
  %v156 = vadd.f32 0.0, %v155
  %v157 = vpop.f32.mrf.mxu0
  %158 = vdwg.mxu0
  %s159 = scalar_lea.vmem %s0, 56
  %v160 = vld [vmem:[%s159] sm:$0xff]
  %v161 = vld [vmem:[%s159 + $0x8] sm:$0xff]
  %v162 = vld [vmem:[%s159 + $0x10] sm:$0xff]
  %v163 = vld [vmem:[%s159 + $0x18] sm:$0xff]
  %v164 = vld [vmem:[%s159 + $0x20] sm:$0xff]
  %v165 = vld [vmem:[%s159 + $0x28] sm:$0xff]
  %v166 = vld [vmem:[%s159 + $0x30] sm:$0x3]
  %v168 = vsel %vm33, %v160, 0
  %v171 = vsel %vm33, %v161, 0
  %v174 = vsel %vm33, %v162, 0
  %v177 = vsel %vm33, %v163, 0
  %v180 = vsel %vm33, %v164, 0
  %v183 = vsel %vm33, %v165, 0
  %v186 = vsel %vm33, %v166, 0
  %188 = vmatprep.subr.mxu0 0.0
  %189 = vmatpush1.msra.mxu0 0.0
  %190 = vmatprep.subr.mxu0 0.0
  %191 = vmatpush1.msra.mxu0 0.0
  %192 = vmatprep.subr.mxu0 0.0
  %193 = vmatpush1.msra.mxu0 0.0
  %194 = vmatprep.subr.mxu0 0.0
  %195 = vmatpush1.msra.mxu0 0.0
  %196 = vmatprep.subr.mxu0 0.0
  %197 = vmatpush1.msra.mxu0 %v57
  %198 = vmatprep.subr.mxu0 0.0
  %199 = vmatpush1.msra.mxu0 %v24
  %200 = vmatprep.subr.mxu0 0.0
  %201 = vmatpush1.msra.mxu0 %v23
  %202 = vmatprep.subr.mxu0 0.0
  %203 = vmatpush1.msra.mxu0 %v22
  %204 = vmatprep.subr.mxu0 0.0
  %205 = vmatpush1.msra.mxu0 %v21
  %206 = vmatprep.subr.mxu0 0.0
  %207 = vmatpush1.msra.mxu0 %v20
  %208 = vmatprep.subr.mxu0 0.0
  %209 = vmatpush1.msra.mxu0 %v19
  %210 = vmatprep.subr.mxu0 0.0
  %211 = vmatpush1.msra.mxu0 %v18
  %212 = vmatprep.subr.mxu0 0.0
  %213 = vmatpush1.msra.mxu0 %v17
  %214 = vmatprep.subr.mxu0 0.0
  %215 = vmatpush1.msra.mxu0 %v16
  %216 = vmatprep.subr.mxu0 0.0
  %217 = vmatpush1.msra.mxu0 %v15
  %218 = vmatprep.subr.mxu0 0.0
  %219 = vmatpush1.msra.mxu0 %v14
  %220 = vmatprep.subr.mxu0 0.0
  %221 = vmatpush2.msra.mxu0 0.0
  %222 = vmatprep.subr.mxu0 0.0
  %223 = vmatpush2.msra.mxu0 0.0
  %224 = vmatprep.subr.mxu0 0.0
  %225 = vmatpush2.msra.mxu0 0.0
  %226 = vmatprep.subr.mxu0 0.0
  %227 = vmatpush2.msra.mxu0 0.0
  %228 = vmatprep.subr.mxu0 0.0
  %229 = vmatpush2.msra.mxu0 0.0
  %230 = vmatprep.subr.mxu0 0.0
  %231 = vmatpush2.msra.mxu0 0.0
  %232 = vmatprep.subr.mxu0 0.0
  %233 = vmatpush2.msra.mxu0 0.0
  %234 = vmatprep.subr.mxu0 0.0
  %235 = vmatpush2.msra.mxu0 0.0
  %236 = vmatprep.subr.mxu0 0.0
  %237 = vmatpush2.msra.mxu0 0.0
  %238 = vmatprep.subr.mxu0 0.0
  %239 = vmatpush2.msra.mxu0 0.0
  %240 = vmatprep.subr.mxu0 0.0
  %241 = vmatpush2.msra.mxu0 0.0
  %242 = vmatprep.subr.mxu0 0.0
  %243 = vmatpush2.msra.mxu0 0.0
  %244 = vmatprep.subr.mxu0 0.0
  %245 = vmatpush2.msra.mxu0 0.0
  %246 = vmatprep.subr.mxu0 0.0
  %247 = vmatpush2.msra.mxu0 0.0
  %248 = vmatprep.subr.mxu0 0.0
  %249 = vmatpush2.msra.mxu0 0.0
  %250 = vmatprep.subr.mxu0 0.0
  %251 = vmatpush2.msra.mxu0 0.0
  %252 = vmatprep.mubr.f32.mxu0 0.0
  %253 = vmatmul.mubr.f32.gmra.mxu0 %v168
  %v254 = vpop.f32.mrf.mxu0
  %v255 = vadd.f32 0.0, %v254
  %v256 = vpop.f32.mrf.mxu0
  %257 = vmatprep.mubr.f32.mxu0 0.0
  %258 = vmatmul.mubr.f32.gmra.mxu0 %v171
  %v259 = vpop.f32.mrf.mxu0
  %v260 = vadd.f32 0.0, %v259
  %v261 = vpop.f32.mrf.mxu0
  %262 = vmatprep.mubr.f32.mxu0 0.0
  %263 = vmatmul.mubr.f32.gmra.mxu0 %v174
  %v264 = vpop.f32.mrf.mxu0
  %v265 = vadd.f32 0.0, %v264
  %v266 = vpop.f32.mrf.mxu0
  %267 = vmatprep.mubr.f32.mxu0 0.0
  %268 = vmatmul.mubr.f32.gmra.mxu0 %v177
  %v269 = vpop.f32.mrf.mxu0
  %v270 = vadd.f32 0.0, %v269
  %v271 = vpop.f32.mrf.mxu0
  %272 = vmatprep.mubr.f32.mxu0 0.0
  %273 = vmatmul.mubr.f32.gmra.mxu0 %v180
  %v274 = vpop.f32.mrf.mxu0
  %v275 = vadd.f32 0.0, %v274
  %v276 = vpop.f32.mrf.mxu0
  %277 = vmatprep.mubr.f32.mxu0 0.0
  %278 = vmatmul.mubr.f32.gmra.mxu0 %v183
  %v279 = vpop.f32.mrf.mxu0
  %v280 = vadd.f32 0.0, %v279
  %v281 = vpop.f32.mrf.mxu0
  %282 = vmatprep.mubr.f32.mxu0 0.0
  %283 = vmatmul.mubr.f32.gmra.mxu0 %v186
  %v284 = vpop.f32.mrf.mxu0
  %v285 = vadd.f32 0.0, %v284
  %v286 = vpop.f32.mrf.mxu0
  %287 = vdwg.mxu0
  %v288 = vmax.f32 %v126, %v255
  %v289 = vmax.f32 %v131, %v260
  %v290 = vmax.f32 %v136, %v265
  %v291 = vmax.f32 %v141, %v270
  %v292 = vmax.f32 %v146, %v275
  %v293 = vmax.f32 %v151, %v280
  %v294 = vmax.f32 %v156, %v285
  %s295 = scalar_lea.vmem %s0, 112
  %v296 = vld [vmem:[%s295] sm:$0xff]
  %v297 = vld [vmem:[%s295 + $0x8] sm:$0xff]
  %v298 = vld [vmem:[%s295 + $0x10] sm:$0xff]
  %v299 = vld [vmem:[%s295 + $0x18] sm:$0xff]
  %v300 = vld [vmem:[%s295 + $0x20] sm:$0xff]
  %v301 = vld [vmem:[%s295 + $0x28] sm:$0xff]
  %v302 = vld [vmem:[%s295 + $0x30] sm:$0x3]
  %v304 = vsel %vm33, %v296, 0
  %v307 = vsel %vm33, %v297, 0
  %v310 = vsel %vm33, %v298, 0
  %v313 = vsel %vm33, %v299, 0
  %v316 = vsel %vm33, %v300, 0
  %v319 = vsel %vm33, %v301, 0
  %v322 = vsel %vm33, %v302, 0
  %324 = vmatprep.subr.mxu0 0.0
  %325 = vmatpush1.msra.mxu0 0.0
  %326 = vmatprep.subr.mxu0 0.0
  %327 = vmatpush1.msra.mxu0 0.0
  %328 = vmatprep.subr.mxu0 0.0
  %329 = vmatpush1.msra.mxu0 0.0
  %330 = vmatprep.subr.mxu0 0.0
  %331 = vmatpush1.msra.mxu0 0.0
  %332 = vmatprep.subr.mxu0 0.0
  %333 = vmatpush1.msra.mxu0 %v57
  %334 = vmatprep.subr.mxu0 0.0
  %335 = vmatpush1.msra.mxu0 %v24
  %336 = vmatprep.subr.mxu0 0.0
  %337 = vmatpush1.msra.mxu0 %v23
  %338 = vmatprep.subr.mxu0 0.0
  %339 = vmatpush1.msra.mxu0 %v22
  %340 = vmatprep.subr.mxu0 0.0
  %341 = vmatpush1.msra.mxu0 %v21
  %342 = vmatprep.subr.mxu0 0.0
  %343 = vmatpush1.msra.mxu0 %v20
  %344 = vmatprep.subr.mxu0 0.0
  %345 = vmatpush1.msra.mxu0 %v19
  %346 = vmatprep.subr.mxu0 0.0
  %347 = vmatpush1.msra.mxu0 %v18
  %348 = vmatprep.subr.mxu0 0.0
  %349 = vmatpush1.msra.mxu0 %v17
  %350 = vmatprep.subr.mxu0 0.0
  %351 = vmatpush1.msra.mxu0 %v16
  %352 = vmatprep.subr.mxu0 0.0
  %353 = vmatpush1.msra.mxu0 %v15
  %354 = vmatprep.subr.mxu0 0.0
  %355 = vmatpush1.msra.mxu0 %v14
  %356 = vmatprep.subr.mxu0 0.0
  %357 = vmatpush2.msra.mxu0 0.0
  %358 = vmatprep.subr.mxu0 0.0
  %359 = vmatpush2.msra.mxu0 0.0
  %360 = vmatprep.subr.mxu0 0.0
  %361 = vmatpush2.msra.mxu0 0.0
  %362 = vmatprep.subr.mxu0 0.0
  %363 = vmatpush2.msra.mxu0 0.0
  %364 = vmatprep.subr.mxu0 0.0
  %365 = vmatpush2.msra.mxu0 0.0
  %366 = vmatprep.subr.mxu0 0.0
  %367 = vmatpush2.msra.mxu0 0.0
  %368 = vmatprep.subr.mxu0 0.0
  %369 = vmatpush2.msra.mxu0 0.0
  %370 = vmatprep.subr.mxu0 0.0
  %371 = vmatpush2.msra.mxu0 0.0
  %372 = vmatprep.subr.mxu0 0.0
  %373 = vmatpush2.msra.mxu0 0.0
  %374 = vmatprep.subr.mxu0 0.0
  %375 = vmatpush2.msra.mxu0 0.0
  %376 = vmatprep.subr.mxu0 0.0
  %377 = vmatpush2.msra.mxu0 0.0
  %378 = vmatprep.subr.mxu0 0.0
  %379 = vmatpush2.msra.mxu0 0.0
  %380 = vmatprep.subr.mxu0 0.0
  %381 = vmatpush2.msra.mxu0 0.0
  %382 = vmatprep.subr.mxu0 0.0
  %383 = vmatpush2.msra.mxu0 0.0
  %384 = vmatprep.subr.mxu0 0.0
  %385 = vmatpush2.msra.mxu0 0.0
  %386 = vmatprep.subr.mxu0 0.0
  %387 = vmatpush2.msra.mxu0 0.0
  %388 = vmatprep.mubr.f32.mxu0 0.0
  %389 = vmatmul.mubr.f32.gmra.mxu0 %v304
  %v390 = vpop.f32.mrf.mxu0
  %v391 = vadd.f32 0.0, %v390
  %v392 = vpop.f32.mrf.mxu0
  %393 = vmatprep.mubr.f32.mxu0 0.0
  %394 = vmatmul.mubr.f32.gmra.mxu0 %v307
  %v395 = vpop.f32.mrf.mxu0
  %v396 = vadd.f32 0.0, %v395
  %v397 = vpop.f32.mrf.mxu0
  %398 = vmatprep.mubr.f32.mxu0 0.0
  %399 = vmatmul.mubr.f32.gmra.mxu0 %v310
  %v400 = vpop.f32.mrf.mxu0
  %v401 = vadd.f32 0.0, %v400
  %v402 = vpop.f32.mrf.mxu0
  %403 = vmatprep.mubr.f32.mxu0 0.0
  %404 = vmatmul.mubr.f32.gmra.mxu0 %v313
  %v405 = vpop.f32.mrf.mxu0
  %v406 = vadd.f32 0.0, %v405
  %v407 = vpop.f32.mrf.mxu0
  %408 = vmatprep.mubr.f32.mxu0 0.0
  %409 = vmatmul.mubr.f32.gmra.mxu0 %v316
  %v410 = vpop.f32.mrf.mxu0
  %v411 = vadd.f32 0.0, %v410
  %v412 = vpop.f32.mrf.mxu0
  %413 = vmatprep.mubr.f32.mxu0 0.0
  %414 = vmatmul.mubr.f32.gmra.mxu0 %v319
  %v415 = vpop.f32.mrf.mxu0
  %v416 = vadd.f32 0.0, %v415
  %v417 = vpop.f32.mrf.mxu0
  %418 = vmatprep.mubr.f32.mxu0 0.0
  %419 = vmatmul.mubr.f32.gmra.mxu0 %v322
  %v420 = vpop.f32.mrf.mxu0
  %v421 = vadd.f32 0.0, %v420
  %v422 = vpop.f32.mrf.mxu0
  %423 = vdwg.mxu0
  %v424 = vmax.f32 %v288, %v391
  %v425 = vmax.f32 %v289, %v396
  %v426 = vmax.f32 %v290, %v401
  %v427 = vmax.f32 %v291, %v406
  %v428 = vmax.f32 %v292, %v411
  %v429 = vmax.f32 %v293, %v416
  %v430 = vmax.f32 %v294, %v421
  %s431 = scalar_lea.vmem %s0, 168
  %v432 = vld [vmem:[%s431] sm:$0xff]
  %v433 = vld [vmem:[%s431 + $0x8] sm:$0xff]
  %v434 = vld [vmem:[%s431 + $0x10] sm:$0xff]
  %v435 = vld [vmem:[%s431 + $0x18] sm:$0xff]
  %v436 = vld [vmem:[%s431 + $0x20] sm:$0xff]
  %v437 = vld [vmem:[%s431 + $0x28] sm:$0xff]
  %v438 = vld [vmem:[%s431 + $0x30] sm:$0x3]
  %v440 = vsel %vm33, %v432, 0
  %v443 = vsel %vm33, %v433, 0
  %v446 = vsel %vm33, %v434, 0
  %v449 = vsel %vm33, %v435, 0
  %v452 = vsel %vm33, %v436, 0
  %v455 = vsel %vm33, %v437, 0
  %v458 = vsel %vm33, %v438, 0
  %460 = vmatprep.subr.mxu0 0.0
  %461 = vmatpush1.msra.mxu0 0.0
  %462 = vmatprep.subr.mxu0 0.0
  %463 = vmatpush1.msra.mxu0 0.0
  %464 = vmatprep.subr.mxu0 0.0
  %465 = vmatpush1.msra.mxu0 0.0
  %466 = vmatprep.subr.mxu0 0.0
  %467 = vmatpush1.msra.mxu0 0.0
  %468 = vmatprep.subr.mxu0 0.0
  %469 = vmatpush1.msra.mxu0 %v57
  %470 = vmatprep.subr.mxu0 0.0
  %471 = vmatpush1.msra.mxu0 %v24
  %472 = vmatprep.subr.mxu0 0.0
  %473 = vmatpush1.msra.mxu0 %v23
  %474 = vmatprep.subr.mxu0 0.0
  %475 = vmatpush1.msra.mxu0 %v22
  %476 = vmatprep.subr.mxu0 0.0
  %477 = vmatpush1.msra.mxu0 %v21
  %478 = vmatprep.subr.mxu0 0.0
  %479 = vmatpush1.msra.mxu0 %v20
  %480 = vmatprep.subr.mxu0 0.0
  %481 = vmatpush1.msra.mxu0 %v19
  %482 = vmatprep.subr.mxu0 0.0
  %483 = vmatpush1.msra.mxu0 %v18
  %484 = vmatprep.subr.mxu0 0.0
  %485 = vmatpush1.msra.mxu0 %v17
  %486 = vmatprep.subr.mxu0 0.0
  %487 = vmatpush1.msra.mxu0 %v16
  %488 = vmatprep.subr.mxu0 0.0
  %489 = vmatpush1.msra.mxu0 %v15
  %490 = vmatprep.subr.mxu0 0.0
  %491 = vmatpush1.msra.mxu0 %v14
  %492 = vmatprep.subr.mxu0 0.0
  %493 = vmatpush2.msra.mxu0 0.0
  %494 = vmatprep.subr.mxu0 0.0
  %495 = vmatpush2.msra.mxu0 0.0
  %496 = vmatprep.subr.mxu0 0.0
  %497 = vmatpush2.msra.mxu0 0.0
  %498 = vmatprep.subr.mxu0 0.0
  %499 = vmatpush2.msra.mxu0 0.0
  %500 = vmatprep.subr.mxu0 0.0
  %501 = vmatpush2.msra.mxu0 0.0
  %502 = vmatprep.subr.mxu0 0.0
  %503 = vmatpush2.msra.mxu0 0.0
  %504 = vmatprep.subr.mxu0 0.0
  %505 = vmatpush2.msra.mxu0 0.0
  %506 = vmatprep.subr.mxu0 0.0
  %507 = vmatpush2.msra.mxu0 0.0
  %508 = vmatprep.subr.mxu0 0.0
  %509 = vmatpush2.msra.mxu0 0.0
  %510 = vmatprep.subr.mxu0 0.0
  %511 = vmatpush2.msra.mxu0 0.0
  %512 = vmatprep.subr.mxu0 0.0
  %513 = vmatpush2.msra.mxu0 0.0
  %514 = vmatprep.subr.mxu0 0.0
  %515 = vmatpush2.msra.mxu0 0.0
  %516 = vmatprep.subr.mxu0 0.0
  %517 = vmatpush2.msra.mxu0 0.0
  %518 = vmatprep.subr.mxu0 0.0
  %519 = vmatpush2.msra.mxu0 0.0
  %520 = vmatprep.subr.mxu0 0.0
  %521 = vmatpush2.msra.mxu0 0.0
  %522 = vmatprep.subr.mxu0 0.0
  %523 = vmatpush2.msra.mxu0 0.0
  %524 = vmatprep.mubr.f32.mxu0 0.0
  %525 = vmatmul.mubr.f32.gmra.mxu0 %v440
  %v526 = vpop.f32.mrf.mxu0
  %v527 = vadd.f32 0.0, %v526
  %v528 = vpop.f32.mrf.mxu0
  %529 = vmatprep.mubr.f32.mxu0 0.0
  %530 = vmatmul.mubr.f32.gmra.mxu0 %v443
  %v531 = vpop.f32.mrf.mxu0
  %v532 = vadd.f32 0.0, %v531
  %v533 = vpop.f32.mrf.mxu0
  %534 = vmatprep.mubr.f32.mxu0 0.0
  %535 = vmatmul.mubr.f32.gmra.mxu0 %v446
  %v536 = vpop.f32.mrf.mxu0
  %v537 = vadd.f32 0.0, %v536
  %v538 = vpop.f32.mrf.mxu0
  %539 = vmatprep.mubr.f32.mxu0 0.0
  %540 = vmatmul.mubr.f32.gmra.mxu0 %v449
  %v541 = vpop.f32.mrf.mxu0
  %v542 = vadd.f32 0.0, %v541
  %v543 = vpop.f32.mrf.mxu0
  %544 = vmatprep.mubr.f32.mxu0 0.0
  %545 = vmatmul.mubr.f32.gmra.mxu0 %v452
  %v546 = vpop.f32.mrf.mxu0
  %v547 = vadd.f32 0.0, %v546
  %v548 = vpop.f32.mrf.mxu0
  %549 = vmatprep.mubr.f32.mxu0 0.0
  %550 = vmatmul.mubr.f32.gmra.mxu0 %v455
  %v551 = vpop.f32.mrf.mxu0
  %v552 = vadd.f32 0.0, %v551
  %v553 = vpop.f32.mrf.mxu0
  %554 = vmatprep.mubr.f32.mxu0 0.0
  %555 = vmatmul.mubr.f32.gmra.mxu0 %v458
  %v556 = vpop.f32.mrf.mxu0
  %v557 = vadd.f32 0.0, %v556
  %v558 = vpop.f32.mrf.mxu0
  %559 = vdwg.mxu0
  %v560 = vmax.f32 %v424, %v527
  %v561 = vmax.f32 %v425, %v532
  %v562 = vmax.f32 %v426, %v537
  %v563 = vmax.f32 %v427, %v542
  %v564 = vmax.f32 %v428, %v547
  %v565 = vmax.f32 %v429, %v552
  %v566 = vmax.f32 %v430, %v557
  %v567 = vld [vmem:[%s2] sm:$0x1]
  %v569 = vlaneseq
  %v570 = vshrl.u32 %v569, 7
  %v571 = vsub.s32 0, %v570
  %v572 = vrot.slane %v567, %v571
  %v574 = vadd.f32 %v560, %v572
  %v575 = vadd.f32 %v561, %v572
  %v576 = vadd.f32 %v562, %v572
  %v577 = vadd.f32 %v563, %v572
  %v578 = vadd.f32 %v564, %v572
  %v579 = vadd.f32 %v565, %v572
  %v580 = vadd.f32 %v566, %v572
  %v581 = vmax.f32 %v574, 0.0
  %v582 = vmax.f32 %v575, 0.0
  %v583 = vmax.f32 %v576, 0.0
  %v584 = vmax.f32 %v577, 0.0
  %v585 = vmax.f32 %v578, 0.0
  %v586 = vmax.f32 %v579, 0.0
  %v587 = vmax.f32 %v580, 0.0
  %588 = vst [vmem:[%s3] sm:$0xff] %v581
  %589 = vst [vmem:[%s3 + $0x8] sm:$0xff] %v582
  %590 = vst [vmem:[%s3 + $0x10] sm:$0xff] %v583
  %591 = vst [vmem:[%s3 + $0x18] sm:$0xff] %v584
  %592 = vst [vmem:[%s3 + $0x20] sm:$0xff] %v585
  %593 = vst [vmem:[%s3 + $0x28] sm:$0xff] %v586
  %594 = vst [vmem:[%s3 + $0x30] sm:$0x3] %v587
  // Predicated region
  $region14: #{simple_cnn_forward.4} parent=0 // pred_check
    _
  $region15: #{simple_cnn_forward.4} parent=0 // pred_check_branch
    %596 = sbr.rel (0) target = $region17
  $region16: #{simple_cnn_forward.4} parent=0 // pred_region
    _
  $region17: #{simple_cnn_forward.4} parent=0 // pred_fallthru
    _
  // Predicated region
  $region18: #{simple_cnn_forward.4} parent=0 // pred_check
    _
  $region19: #{simple_cnn_forward.4} parent=0 // pred_check_branch
    %598 = sbr.rel (0) target = $region21
  $region20: #{simple_cnn_forward.4} parent=0 // pred_region
    _
  $region21: #{simple_cnn_forward.4} parent=0 // pred_fallthru
    _

</llo_original>
